<compile_context>
chip_gen: v5e
topology: v5e:2x2
jax: 0.10.0
libtpu: 0.0.40
codegen_flags: <defaults>
</compile_context>

<pallas_src>
import functools

import jax
import jax.numpy as jnp
from jax.experimental import pallas as pl
from jax.experimental.pallas import tpu as pltpu

WEIGHT_CE = 1.0
WEIGHT_DICE = 1.0
WEIGHT_CL = 0.002
DICE_SMOOTH = 1e-5
CL_SMOOTH = 1.0
CL_ITERS = 3

_PAD_BIG = 1e30  # finite stand-in for +/- inf padding of the min/max pools
_NUM_STATS = 8   # rows of the per-(b,c) partial-statistics tile


# ---------------------------------------------------------------------------
# Shared soft-skeleton control flow (erode deduplicated: the erosion result is
# carried forward so each iteration performs exactly 1 erode + 1 dilate; this
# is mathematically identical to the original clDice soft_skel).
# The four neighborhood ops (3-wide min / max along H and W with +/-inf
# boundary padding) are injected so the Pallas kernel can use pltpu.roll while
# the pure-JAX reference uses an independent concatenate-based implementation.
# ---------------------------------------------------------------------------
def _soft_skel_core(x, iters, min3h, min3w, max3h, max3w):
    def erode(a):    # torch: min(-maxpool(-x,(3,1)), -maxpool(-x,(1,3)))
        return jnp.minimum(min3h(a), min3w(a))

    def dilate(a):   # torch: maxpool(x,(3,3)) (separable)
        return max3h(max3w(a))

    img = x
    e = erode(img)                                   # erode^1
    skel = jnp.maximum(img - dilate(e), 0.0)         # img - opening(img)
    for _ in range(iters):
        img = e                                      # img <- erode(img)
        e = erode(img)                               # next erosion (reused)
        delta = jnp.maximum(img - dilate(e), 0.0)    # img - opening(img)
        skel = skel + jnp.maximum(delta - skel * delta, 0.0)
    return skel


# ---------------------------------------------------------------------------
# Kernel-side neighborhood ops: pltpu.roll (XLU slot) + thin edge masks built
# once from (H,1)/(1,W) iotas and broadcast inside jnp.where (no full-plane
# int32/bool mask buffers kept live).
# ---------------------------------------------------------------------------
def _roll_neighborhood_ops(H, W):
    rows = jax.lax.broadcasted_iota(jnp.int32, (H, 1), 0)   # (H, 1)
    cols = jax.lax.broadcasted_iota(jnp.int32, (1, W), 1)   # (1, W)
    top_row = rows == 0
    bot_row = rows == H - 1
    first_col = cols == 0
    last_col = cols == W - 1

    def nbr_h(a, pad):
        # returns (x[i+1, :], x[i-1, :]) with out-of-plane rows replaced by pad
        plus = jnp.where(bot_row, pad, pltpu.roll(a, H - 1, axis=0))
        minus = jnp.where(top_row, pad, pltpu.roll(a, 1, axis=0))
        return plus, minus

    def nbr_w(a, pad):
        # returns (x[:, j+1], x[:, j-1]) with out-of-plane cols replaced by pad
        plus = jnp.where(last_col, pad, pltpu.roll(a, W - 1, axis=1))
        minus = jnp.where(first_col, pad, pltpu.roll(a, 1, axis=1))
        return plus, minus

    def min3h(a):
        p, m = nbr_h(a, _PAD_BIG)
        return jnp.minimum(jnp.minimum(p, a), m)

    def min3w(a):
        p, m = nbr_w(a, _PAD_BIG)
        return jnp.minimum(jnp.minimum(p, a), m)

    def max3h(a):
        p, m = nbr_h(a, -_PAD_BIG)
        return jnp.maximum(jnp.maximum(p, a), m)

    def max3w(a):
        p, m = nbr_w(a, -_PAD_BIG)
        return jnp.maximum(jnp.maximum(p, a), m)

    return min3h, min3w, max3h, max3w


# ---------------------------------------------------------------------------
# Pallas kernel: one (b, c) plane per grid step, fully independent.
# Output rows (each a lane-partial sum over H, reduced over W in the wrapper):
#   0: sum BCE-with-logits        1: sum p*y (dice intersect)
#   2: sum p                      3: sum y
#   4: sum skel(p)*y              5: sum skel(p)        (fg channels only)
#   6: sum skel(y)*p              7: sum skel(y)        (fg channels only)
# ---------------------------------------------------------------------------
def _loss_kernel(logits_ref, target_ref, out_ref, *, H, W):
    c = pl.program_id(1)

    x = logits_ref[...].astype(jnp.float32)   # (H, W) logits
    y = target_ref[...].astype(jnp.float32)   # (H, W) binary target

    def lane_sum(a):                          # (H, W) -> (1, W) sublane reduce
        return jnp.sum(a, axis=0, keepdims=True)

    # Shared exp(-|x|) for BCE-with-logits (stable) and sigmoid (stable both
    # directions): one EUP exp instead of two.
    e = jnp.exp(-jnp.abs(x))
    bce = jnp.maximum(x, 0.0) - x * y + jnp.log(1.0 + e)
    inv_1pe = 1.0 / (1.0 + e)
    p = jnp.where(x >= 0.0, inv_1pe, e * inv_1pe)   # sigmoid(x)

    # Rows 0-3 are stored before skeletonization so nothing but p and y stays
    # live across the (expensive) morphology below.
    out_ref[pl.ds(0, 1), :] = lane_sum(bce)
    out_ref[pl.ds(1, 1), :] = lane_sum(p * y)
    out_ref[pl.ds(2, 1), :] = lane_sum(p)
    out_ref[pl.ds(3, 1), :] = lane_sum(y)

    # clDice uses foreground channels only -> skip skeletonization (the vast
    # majority of per-step compute) entirely for the background channel.
    @pl.when(c == 0)
    def _bg():
        out_ref[pl.ds(4, 4), :] = jnp.zeros((4, W), jnp.float32)

    @pl.when(c >= 1)
    def _cl():
        min3h, min3w, max3h, max3w = _roll_neighborhood_ops(H, W)
        skel_p = _soft_skel_core(p, CL_ITERS, min3h, min3w, max3h, max3w)
        # skel_p is fully consumed before skel_t is built (smaller live set).
        out_ref[pl.ds(4, 1), :] = lane_sum(skel_p * y)
        out_ref[pl.ds(5, 1), :] = lane_sum(skel_p)
        skel_t = _soft_skel_core(y, CL_ITERS, min3h, min3w, max3h, max3w)
        out_ref[pl.ds(6, 1), :] = lane_sum(skel_t * p)
        out_ref[pl.ds(7, 1), :] = lane_sum(skel_t)


def _vmem_limit_bytes():
    """Generation-aware scoped-VMEM limit (~65% of physical capacity)."""
    cap = None
    try:
        cap = getattr(pltpu.get_tpu_info(), "vmem_capacity_bytes", None)
    except Exception:
        cap = None
    if not cap:
        cap = 64 * 1024 * 1024   # conservative (v7x per-TC) fallback
    return int(cap * 0.65)


def cl_and_dc_and_bce_loss(net_output, target):
    """net_output: (B, C, H, W) logits; target: (B, C, H, W) binary regions.

    Inputs may be f32 or bf16 (the kernel upcasts to f32 internally).
    """
    B, C, H, W = net_output.shape
    assert H % 8 == 0 and W % 128 == 0, (
        "kernel requires H % 8 == 0 and W % 128 == 0 (TPU native tiling)")

    kernel = functools.partial(_loss_kernel, H=H, W=W)
    sq = pl.Squeezed()
    partials = pl.pallas_call(
        kernel,
        out_shape=jax.ShapeDtypeStruct((B, C, _NUM_STATS, W), jnp.float32),
        grid=(B, C),
        in_specs=[
            pl.BlockSpec((sq, sq, H, W), lambda b, c: (b, c, 0, 0)),
            pl.BlockSpec((sq, sq, H, W), lambda b, c: (b, c, 0, 0)),
        ],
        out_specs=pl.BlockSpec((sq, sq, _NUM_STATS, W),
                               lambda b, c: (b, c, 0, 0)),
        compiler_params=pltpu.CompilerParams(
            # Force the megacore split onto the batch axis so one v7x core
            # doesn't receive only the cheap background (c==0) planes.
            dimension_semantics=("parallel", "arbitrary"),
            vmem_limit_bytes=_vmem_limit_bytes(),
        ),
    )(net_output, target)

    # --- tiny scalar epilogue (runs as plain XLA ops) ---------------------
    stats = jnp.sum(partials, axis=-1)                      # (B, C, 8)

    bce_loss = jnp.sum(stats[..., 0]) / float(B * C * H * W)

    intersect = stats[..., 1]
    sum_pred = stats[..., 2]
    sum_gt = stats[..., 3]
    dc = (2.0 * intersect + DICE_SMOOTH) / jnp.maximum(
        sum_pred + sum_gt + DICE_SMOOTH, 1e-8)
    dc_loss = -jnp.mean(dc)                                 # batch_dice=False, do_bg=True

    tprec = (jnp.sum(stats[..., 4]) + CL_SMOOTH) / (jnp.sum(stats[..., 5]) + CL_SMOOTH)
    tsens = (jnp.sum(stats[..., 6]) + CL_SMOOTH) / (jnp.sum(stats[..., 7]) + CL_SMOOTH)
    cl_loss = 1.0 - 2.0 * (tprec * tsens) / (tprec + tsens)

    return WEIGHT_CE * bce_loss + WEIGHT_DICE * dc_loss + WEIGHT_CL * cl_loss


# ---------------------------------------------------------------------------
# Pure-JAX reference (independent concatenate-based morphology, no Pallas).
# ---------------------------------------------------------------------------
def _ref_shift_h(x, delta, pad_val):
    h, w = x.shape
    pad = jnp.full((1, w), pad_val, x.dtype)
    if delta == 1:
        return jnp.concatenate([x[1:, :], pad], axis=0)
    return jnp.concatenate([pad, x[:-1, :]], axis=0)


def _ref_shift_w(x, delta, pad_val):
    h, w = x.shape
    pad = jnp.full((h, 1), pad_val, x.dtype)
    if delta == 1:
        return jnp.concatenate([x[:, 1:], pad], axis=1)
    return jnp.concatenate([pad, x[:, :-1]], axis=1)


def _ref_min3h(x):
    return jnp.minimum(jnp.minimum(_ref_shift_h(x, 1, _PAD_BIG), x),
                       _ref_shift_h(x, -1, _PAD_BIG))


def _ref_min3w(x):
    return jnp.minimum(jnp.minimum(_ref_shift_w(x, 1, _PAD_BIG), x),
                       _ref_shift_w(x, -1, _PAD_BIG))


def _ref_max3h(x):
    return jnp.maximum(jnp.maximum(_ref_shift_h(x, 1, -_PAD_BIG), x),
                       _ref_shift_h(x, -1, -_PAD_BIG))


def _ref_max3w(x):
    return jnp.maximum(jnp.maximum(_ref_shift_w(x, 1, -_PAD_BIG), x),
                       _ref_shift_w(x, -1, -_PAD_BIG))


def _ref_soft_skel(x):
    return _soft_skel_core(x, CL_ITERS, _ref_min3h, _ref_min3w,
                           _ref_max3h, _ref_max3w)


def _reference_loss(net_output, target):
    x = net_output.astype(jnp.float32)
    y = target.astype(jnp.float32)
    B, C, H, W = x.shape

    bce = jnp.mean(jnp.maximum(x, 0.0) - x * y + jnp.log(1.0 + jnp.exp(-jnp.abs(x))))

    p = 1.0 / (1.0 + jnp.exp(-x))
    axes = (2, 3)
    intersect = jnp.sum(p * y, axes)
    sum_pred = jnp.sum(p, axes)
    sum_gt = jnp.sum(y, axes)
    dc = (2.0 * intersect + DICE_SMOOTH) / jnp.maximum(
        sum_pred + sum_gt + DICE_SMOOTH, 1e-8)
    dc_loss = -jnp.mean(dc)

    skel_p = jax.vmap(jax.vmap(_ref_soft_skel))(p)
    skel_t = jax.vmap(jax.vmap(_ref_soft_skel))(y)
    tprec = (jnp.sum(skel_p[:, 1:] * y[:, 1:]) + CL_SMOOTH) / (
        jnp.sum(skel_p[:, 1:]) + CL_SMOOTH)
    tsens = (jnp.sum(skel_t[:, 1:] * p[:, 1:]) + CL_SMOOTH) / (
        jnp.sum(skel_t[:, 1:]) + CL_SMOOTH)
    cl_loss = 1.0 - 2.0 * (tprec * tsens) / (tprec + tsens)

    return WEIGHT_CE * bce + WEIGHT_DICE * dc_loss + WEIGHT_CL * cl_loss


if __name__ == "__main__":
    key = jax.random.PRNGKey(0)
    k1, k2 = jax.random.split(key)
    # Lane-dense small example: W is the native 128-lane width.
    B, C, H, W = 2, 2, 16, 128
    net_output = jax.random.normal(k1, (B, C, H, W), dtype=jnp.float32)
    target = jax.random.bernoulli(k2, p=0.3, shape=(B, C, H, W)).astype(jnp.float32)

    loss = jax.block_until_ready(cl_and_dc_and_bce_loss(net_output, target))
    ref = jax.block_until_ready(_reference_loss(net_output, target))

    assert jnp.isfinite(loss), "kernel produced non-finite loss"
    assert abs(float(loss) - float(ref)) < 1e-3, (float(loss), float(ref))
    print("KERNEL_OK")
</pallas_src>

<mosaic_0001>
module attributes {stable_mosaic.version = 11 : i64} {
  func.func @_loss_kernel(%arg0: i32, %arg1: i32, %arg2: memref<1x1x16x128xf32, #tpu.memory_space<vmem>>, %arg3: memref<1x1x16x128xf32, #tpu.memory_space<vmem>>, %arg4: memref<1x1x8x128xf32, #tpu.memory_space<vmem>>) attributes {dimension_semantics = [#tpu.dimension_semantics<parallel>, #tpu.dimension_semantics<arbitrary>], iteration_bounds = array<i64: 2, 2>, scalar_prefetch = 0 : i64, scratch_operands = 0 : i64, tpu.core_type = #tpu.core_type<tc>, window_params = [{transform_indices = @transform_0, window_bounds = array<i64: 1, 1, 16, 128>}, {transform_indices = @transform_1, window_bounds = array<i64: 1, 1, 16, 128>}, {transform_indices = @transform_2, window_bounds = array<i64: 1, 1, 8, 128>}]} {
    %c0 = arith.constant 0 : index
    %c0_0 = arith.constant 0 : index
    %c0_1 = arith.constant 0 : index
    %c0_2 = arith.constant 0 : index
    %0 = vector.load %arg2[%c0, %c0_0, %c0_1, %c0_2] : memref<1x1x16x128xf32, #tpu.memory_space<vmem>>, vector<1x1x16x128xf32>
    %1 = vector.shape_cast %0 : vector<1x1x16x128xf32> to vector<16x128xf32>
    %c0_3 = arith.constant 0 : index
    %c0_4 = arith.constant 0 : index
    %c0_5 = arith.constant 0 : index
    %c0_6 = arith.constant 0 : index
    %2 = vector.load %arg3[%c0_3, %c0_4, %c0_5, %c0_6] : memref<1x1x16x128xf32, #tpu.memory_space<vmem>>, vector<1x1x16x128xf32>
    %3 = vector.shape_cast %2 : vector<1x1x16x128xf32> to vector<16x128xf32>
    %4 = math.absf %1 : vector<16x128xf32>
    %cst = arith.constant 0.000000e+00 : f32
    %5 = vector.broadcast %cst : f32 to vector<16x128xf32>
    %6 = arith.subf %5, %4 : vector<16x128xf32>
    %7 = math.exp %6 : vector<16x128xf32>
    %cst_7 = arith.constant 0.000000e+00 : f32
    %8 = vector.broadcast %cst_7 : f32 to vector<16x128xf32>
    %9 = arith.maximumf %1, %8 : vector<16x128xf32>
    %10 = arith.mulf %1, %3 : vector<16x128xf32>
    %11 = arith.subf %9, %10 : vector<16x128xf32>
    %cst_8 = arith.constant 1.000000e+00 : f32
    %12 = vector.broadcast %cst_8 : f32 to vector<16x128xf32>
    %13 = arith.addf %12, %7 : vector<16x128xf32>
    %14 = math.log %13 : vector<16x128xf32>
    %15 = arith.addf %11, %14 : vector<16x128xf32>
    %cst_9 = arith.constant 1.000000e+00 : f32
    %16 = vector.broadcast %cst_9 : f32 to vector<16x128xf32>
    %17 = arith.addf %16, %7 : vector<16x128xf32>
    %cst_10 = arith.constant 1.000000e+00 : f32
    %18 = vector.broadcast %cst_10 : f32 to vector<16x128xf32>
    %19 = arith.divf %18, %17 : vector<16x128xf32>
    %cst_11 = arith.constant 0.000000e+00 : f32
    %20 = vector.broadcast %cst_11 : f32 to vector<16x128xf32>
    %21 = arith.cmpf oge, %1, %20 : vector<16x128xf32>
    %22 = arith.mulf %7, %19 : vector<16x128xf32>
    %23 = arith.select %21, %19, %22 : vector<16x128xi1>, vector<16x128xf32>
    %cst_12 = arith.constant dense<0.000000e+00> : vector<128xf32>
    %24 = vector.multi_reduction <add>, %15, %cst_12 [0] : vector<16x128xf32> to vector<128xf32>
    %25 = vector.shape_cast %24 : vector<128xf32> to vector<1x128xf32>
    %c0_13 = arith.constant 0 : index
    %c0_14 = arith.constant 0 : index
    %c0_15 = arith.constant 0 : index
    %c0_16 = arith.constant 0 : index
    %26 = vector.load %arg4[%c0_13, %c0_14, %c0_15, %c0_16] : memref<1x1x8x128xf32, #tpu.memory_space<vmem>>, vector<1x1x1x128xf32>
    %27 = vector.shape_cast %26 : vector<1x1x1x128xf32> to vector<1x128xf32>
    %28 = vector.shape_cast %25 : vector<1x128xf32> to vector<1x1x1x128xf32>
    tpu.vector_store %arg4[%c0_13, %c0_14, %c0_15, %c0_16], %28 {strides = array<i32>} : memref<1x1x8x128xf32, #tpu.memory_space<vmem>>, vector<1x1x1x128xf32>,
    %29 = arith.mulf %23, %3 : vector<16x128xf32>
    %cst_17 = arith.constant dense<0.000000e+00> : vector<128xf32>
    %30 = vector.multi_reduction <add>, %29, %cst_17 [0] : vector<16x128xf32> to vector<128xf32>
    %31 = vector.shape_cast %30 : vector<128xf32> to vector<1x128xf32>
    %c0_18 = arith.constant 0 : index
    %c0_19 = arith.constant 0 : index
    %c1 = arith.constant 1 : index
    %c0_20 = arith.constant 0 : index
    %32 = vector.load %arg4[%c0_18, %c0_19, %c1, %c0_20] : memref<1x1x8x128xf32, #tpu.memory_space<vmem>>, vector<1x1x1x128xf32>
    %33 = vector.shape_cast %32 : vector<1x1x1x128xf32> to vector<1x128xf32>
    %34 = vector.shape_cast %31 : vector<1x128xf32> to vector<1x1x1x128xf32>
    tpu.vector_store %arg4[%c0_18, %c0_19, %c1, %c0_20], %34 {strides = array<i32>} : memref<1x1x8x128xf32, #tpu.memory_space<vmem>>, vector<1x1x1x128xf32>,
    %cst_21 = arith.constant dense<0.000000e+00> : vector<128xf32>
    %35 = vector.multi_reduction <add>, %23, %cst_21 [0] : vector<16x128xf32> to vector<128xf32>
    %36 = vector.shape_cast %35 : vector<128xf32> to vector<1x128xf32>
    %c0_22 = arith.constant 0 : index
    %c0_23 = arith.constant 0 : index
    %c2 = arith.constant 2 : index
    %c0_24 = arith.constant 0 : index
    %37 = vector.load %arg4[%c0_22, %c0_23, %c2, %c0_24] : memref<1x1x8x128xf32, #tpu.memory_space<vmem>>, vector<1x1x1x128xf32>
    %38 = vector.shape_cast %37 : vector<1x1x1x128xf32> to vector<1x128xf32>
    %39 = vector.shape_cast %36 : vector<1x128xf32> to vector<1x1x1x128xf32>
    tpu.vector_store %arg4[%c0_22, %c0_23, %c2, %c0_24], %39 {strides = array<i32>} : memref<1x1x8x128xf32, #tpu.memory_space<vmem>>, vector<1x1x1x128xf32>,
    %cst_25 = arith.constant dense<0.000000e+00> : vector<128xf32>
    %40 = vector.multi_reduction <add>, %3, %cst_25 [0] : vector<16x128xf32> to vector<128xf32>
    %41 = vector.shape_cast %40 : vector<128xf32> to vector<1x128xf32>
    %c0_26 = arith.constant 0 : index
    %c0_27 = arith.constant 0 : index
    %c3 = arith.constant 3 : index
    %c0_28 = arith.constant 0 : index
    %42 = vector.load %arg4[%c0_26, %c0_27, %c3, %c0_28] : memref<1x1x8x128xf32, #tpu.memory_space<vmem>>, vector<1x1x1x128xf32>
    %43 = vector.shape_cast %42 : vector<1x1x1x128xf32> to vector<1x128xf32>
    %44 = vector.shape_cast %41 : vector<1x128xf32> to vector<1x1x1x128xf32>
    tpu.vector_store %arg4[%c0_26, %c0_27, %c3, %c0_28], %44 {strides = array<i32>} : memref<1x1x8x128xf32, #tpu.memory_space<vmem>>, vector<1x1x1x128xf32>,
    %c0_i32 = arith.constant 0 : i32
    %45 = arith.cmpi eq, %arg1, %c0_i32 : i32
    %46 = arith.extui %45 : i1 to i32
    %c0_i32_29 = arith.constant 0 : i32
    %47 = arith.cmpi ne, %46, %c0_i32_29 : i32
    scf.if %47 {
      %cst_31 = arith.constant 0.000000e+00 : f32
      %51 = vector.broadcast %cst_31 : f32 to vector<4x128xf32>
      %c0_32 = arith.constant 0 : index
      %c0_33 = arith.constant 0 : index
      %c4 = arith.constant 4 : index
      %c0_34 = arith.constant 0 : index
      %52 = vector.load %arg4[%c0_32, %c0_33, %c4, %c0_34] : memref<1x1x8x128xf32, #tpu.memory_space<vmem>>, vector<1x1x4x128xf32>
      %53 = vector.shape_cast %52 : vector<1x1x4x128xf32> to vector<4x128xf32>
      %54 = vector.shape_cast %51 : vector<4x128xf32> to vector<1x1x4x128xf32>
      tpu.vector_store %arg4[%c0_32, %c0_33, %c4, %c0_34], %54 {strides = array<i32>} : memref<1x1x8x128xf32, #tpu.memory_space<vmem>>, vector<1x1x4x128xf32>,
    } else {
    }
    %c1_i32 = arith.constant 1 : i32
    %48 = arith.cmpi sge, %arg1, %c1_i32 : i32
    %49 = arith.extui %48 : i1 to i32
    %c0_i32_30 = arith.constant 0 : i32
    %50 = arith.cmpi ne, %49, %c0_i32_30 : i32
    scf.if %50 {
      %51 = tpu.iota {dimensions = array<i32: 0>} : vector<16x1xi32>
      %52 = tpu.iota {dimensions = array<i32: 1>} : vector<1x128xi32>
      %c0_i32_31 = arith.constant 0 : i32
      %53 = vector.broadcast %c0_i32_31 : i32 to vector<16x1xi32>
      %54 = arith.cmpi eq, %51, %53 : vector<16x1xi32>
      %c15_i32 = arith.constant 15 : i32
      %55 = vector.broadcast %c15_i32 : i32 to vector<16x1xi32>
      %56 = arith.cmpi eq, %51, %55 : vector<16x1xi32>
      %c0_i32_32 = arith.constant 0 : i32
      %57 = vector.broadcast %c0_i32_32 : i32 to vector<1x128xi32>
      %58 = arith.cmpi eq, %52, %57 : vector<1x128xi32>
      %c127_i32 = arith.constant 127 : i32
      %59 = vector.broadcast %c127_i32 : i32 to vector<1x128xi32>
      %60 = arith.cmpi eq, %52, %59 : vector<1x128xi32>
      %c15_i32_33 = arith.constant 15 : i32
      %61 = tpu.dynamic_rotate %23 by %c15_i32_33 dim 0 : vector<16x128xf32>, i32 -> vector<16x128xf32>
      %cst_34 = arith.constant 1.000000e+30 : f32
      %62 = vector.shape_cast %56 : vector<16x1xi1> to vector<16x1xi1>
      %63 = vector.broadcast %62 : vector<16x1xi1> to vector<16x128xi1>
      %64 = vector.broadcast %cst_34 : f32 to vector<16x128xf32>
      %65 = arith.select %63, %64, %61 : vector<16x128xi1>, vector<16x128xf32>
      %c1_i32_35 = arith.constant 1 : i32
      %66 = tpu.dynamic_rotate %23 by %c1_i32_35 dim 0 : vector<16x128xf32>, i32 -> vector<16x128xf32>
      %cst_36 = arith.constant 1.000000e+30 : f32
      %67 = vector.shape_cast %54 : vector<16x1xi1> to vector<16x1xi1>
      %68 = vector.broadcast %67 : vector<16x1xi1> to vector<16x128xi1>
      %69 = vector.broadcast %cst_36 : f32 to vector<16x128xf32>
      %70 = arith.select %68, %69, %66 : vector<16x128xi1>, vector<16x128xf32>
      %71 = arith.minimumf %65, %23 : vector<16x128xf32>
      %72 = arith.minimumf %71, %70 : vector<16x128xf32>
      %c127_i32_37 = arith.constant 127 : i32
      %73 = tpu.dynamic_rotate %23 by %c127_i32_37 dim 1 : vector<16x128xf32>, i32 -> vector<16x128xf32>
      %cst_38 = arith.constant 1.000000e+30 : f32
      %74 = vector.shape_cast %60 : vector<1x128xi1> to vector<1x128xi1>
      %75 = vector.broadcast %74 : vector<1x128xi1> to vector<16x128xi1>
      %76 = vector.broadcast %cst_38 : f32 to vector<16x128xf32>
      %77 = arith.select %75, %76, %73 : vector<16x128xi1>, vector<16x128xf32>
      %c1_i32_39 = arith.constant 1 : i32
      %78 = tpu.dynamic_rotate %23 by %c1_i32_39 dim 1 : vector<16x128xf32>, i32 -> vector<16x128xf32>
      %cst_40 = arith.constant 1.000000e+30 : f32
      %79 = vector.shape_cast %58 : vector<1x128xi1> to vector<1x128xi1>
      %80 = vector.broadcast %79 : vector<1x128xi1> to vector<16x128xi1>
      %81 = vector.broadcast %cst_40 : f32 to vector<16x128xf32>
      %82 = arith.select %80, %81, %78 : vector<16x128xi1>, vector<16x128xf32>
      %83 = arith.minimumf %77, %23 : vector<16x128xf32>
      %84 = arith.minimumf %83, %82 : vector<16x128xf32>
      %85 = arith.minimumf %72, %84 : vector<16x128xf32>
      %c127_i32_41 = arith.constant 127 : i32
      %86 = tpu.dynamic_rotate %85 by %c127_i32_41 dim 1 : vector<16x128xf32>, i32 -> vector<16x128xf32>
      %cst_42 = arith.constant -1.000000e+30 : f32
      %87 = vector.shape_cast %60 : vector<1x128xi1> to vector<1x128xi1>
      %88 = vector.broadcast %87 : vector<1x128xi1> to vector<16x128xi1>
      %89 = vector.broadcast %cst_42 : f32 to vector<16x128xf32>
      %90 = arith.select %88, %89, %86 : vector<16x128xi1>, vector<16x128xf32>
      %c1_i32_43 = arith.constant 1 : i32
      %91 = tpu.dynamic_rotate %85 by %c1_i32_43 dim 1 : vector<16x128xf32>, i32 -> vector<16x128xf32>
      %cst_44 = arith.constant -1.000000e+30 : f32
      %92 = vector.shape_cast %58 : vector<1x128xi1> to vector<1x128xi1>
      %93 = vector.broadcast %92 : vector<1x128xi1> to vector<16x128xi1>
      %94 = vector.broadcast %cst_44 : f32 to vector<16x128xf32>
      %95 = arith.select %93, %94, %91 : vector<16x128xi1>, vector<16x128xf32>
      %96 = arith.maximumf %90, %85 : vector<16x128xf32>
      %97 = arith.maximumf %96, %95 : vector<16x128xf32>
      %c15_i32_45 = arith.constant 15 : i32
      %98 = tpu.dynamic_rotate %97 by %c15_i32_45 dim 0 : vector<16x128xf32>, i32 -> vector<16x128xf32>
      %cst_46 = arith.constant -1.000000e+30 : f32
      %99 = vector.shape_cast %56 : vector<16x1xi1> to vector<16x1xi1>
      %100 = vector.broadcast %99 : vector<16x1xi1> to vector<16x128xi1>
      %101 = vector.broadcast %cst_46 : f32 to vector<16x128xf32>
      %102 = arith.select %100, %101, %98 : vector<16x128xi1>, vector<16x128xf32>
      %c1_i32_47 = arith.constant 1 : i32
      %103 = tpu.dynamic_rotate %97 by %c1_i32_47 dim 0 : vector<16x128xf32>, i32 -> vector<16x128xf32>
      %cst_48 = arith.constant -1.000000e+30 : f32
      %104 = vector.shape_cast %54 : vector<16x1xi1> to vector<16x1xi1>
      %105 = vector.broadcast %104 : vector<16x1xi1> to vector<16x128xi1>
      %106 = vector.broadcast %cst_48 : f32 to vector<16x128xf32>
      %107 = arith.select %105, %106, %103 : vector<16x128xi1>, vector<16x128xf32>
      %108 = arith.maximumf %102, %97 : vector<16x128xf32>
      %109 = arith.maximumf %108, %107 : vector<16x128xf32>
      %110 = arith.subf %23, %109 : vector<16x128xf32>
      %cst_49 = arith.constant 0.000000e+00 : f32
      %111 = vector.broadcast %cst_49 : f32 to vector<16x128xf32>
      %112 = arith.maximumf %110, %111 : vector<16x128xf32>
      %c15_i32_50 = arith.constant 15 : i32
      %113 = tpu.dynamic_rotate %85 by %c15_i32_50 dim 0 : vector<16x128xf32>, i32 -> vector<16x128xf32>
      %cst_51 = arith.constant 1.000000e+30 : f32
      %114 = vector.shape_cast %56 : vector<16x1xi1> to vector<16x1xi1>
      %115 = vector.broadcast %114 : vector<16x1xi1> to vector<16x128xi1>
      %116 = vector.broadcast %cst_51 : f32 to vector<16x128xf32>
      %117 = arith.select %115, %116, %113 : vector<16x128xi1>, vector<16x128xf32>
      %c1_i32_52 = arith.constant 1 : i32
      %118 = tpu.dynamic_rotate %85 by %c1_i32_52 dim 0 : vector<16x128xf32>, i32 -> vector<16x128xf32>
      %cst_53 = arith.constant 1.000000e+30 : f32
      %119 = vector.shape_cast %54 : vector<16x1xi1> to vector<16x1xi1>
      %120 = vector.broadcast %119 : vector<16x1xi1> to vector<16x128xi1>
      %121 = vector.broadcast %cst_53 : f32 to vector<16x128xf32>
      %122 = arith.select %120, %121, %118 : vector<16x128xi1>, vector<16x128xf32>
      %123 = arith.minimumf %117, %85 : vector<16x128xf32>
      %124 = arith.minimumf %123, %122 : vector<16x128xf32>
      %c127_i32_54 = arith.constant 127 : i32
      %125 = tpu.dynamic_rotate %85 by %c127_i32_54 dim 1 : vector<16x128xf32>, i32 -> vector<16x128xf32>
      %cst_55 = arith.constant 1.000000e+30 : f32
      %126 = vector.shape_cast %60 : vector<1x128xi1> to vector<1x128xi1>
      %127 = vector.broadcast %126 : vector<1x128xi1> to vector<16x128xi1>
      %128 = vector.broadcast %cst_55 : f32 to vector<16x128xf32>
      %129 = arith.select %127, %128, %125 : vector<16x128xi1>, vector<16x128xf32>
      %c1_i32_56 = arith.constant 1 : i32
      %130 = tpu.dynamic_rotate %85 by %c1_i32_56 dim 1 : vector<16x128xf32>, i32 -> vector<16x128xf32>
      %cst_57 = arith.constant 1.000000e+30 : f32
      %131 = vector.shape_cast %58 : vector<1x128xi1> to vector<1x128xi1>
      %132 = vector.broadcast %131 : vector<1x128xi1> to vector<16x128xi1>
      %133 = vector.broadcast %cst_57 : f32 to vector<16x128xf32>
      %134 = arith.select %132, %133, %130 : vector<16x128xi1>, vector<16x128xf32>
      %135 = arith.minimumf %129, %85 : vector<16x128xf32>
      %136 = arith.minimumf %135, %134 : vector<16x128xf32>
      %137 = arith.minimumf %124, %136 : vector<16x128xf32>
      %c127_i32_58 = arith.constant 127 : i32
      %138 = tpu.dynamic_rotate %137 by %c127_i32_58 dim 1 : vector<16x128xf32>, i32 -> vector<16x128xf32>
      %cst_59 = arith.constant -1.000000e+30 : f32
      %139 = vector.shape_cast %60 : vector<1x128xi1> to vector<1x128xi1>
      %140 = vector.broadcast %139 : vector<1x128xi1> to vector<16x128xi1>
      %141 = vector.broadcast %cst_59 : f32 to vector<16x128xf32>
      %142 = arith.select %140, %141, %138 : vector<16x128xi1>, vector<16x128xf32>
      %c1_i32_60 = arith.constant 1 : i32
      %143 = tpu.dynamic_rotate %137 by %c1_i32_60 dim 1 : vector<16x128xf32>, i32 -> vector<16x128xf32>
      %cst_61 = arith.constant -1.000000e+30 : f32
      %144 = vector.shape_cast %58 : vector<1x128xi1> to vector<1x128xi1>
      %145 = vector.broadcast %144 : vector<1x128xi1> to vector<16x128xi1>
      %146 = vector.broadcast %cst_61 : f32 to vector<16x128xf32>
      %147 = arith.select %145, %146, %143 : vector<16x128xi1>, vector<16x128xf32>
      %148 = arith.maximumf %142, %137 : vector<16x128xf32>
      %149 = arith.maximumf %148, %147 : vector<16x128xf32>
      %c15_i32_62 = arith.constant 15 : i32
      %150 = tpu.dynamic_rotate %149 by %c15_i32_62 dim 0 : vector<16x128xf32>, i32 -> vector<16x128xf32>
      %cst_63 = arith.constant -1.000000e+30 : f32
      %151 = vector.shape_cast %56 : vector<16x1xi1> to vector<16x1xi1>
      %152 = vector.broadcast %151 : vector<16x1xi1> to vector<16x128xi1>
      %153 = vector.broadcast %cst_63 : f32 to vector<16x128xf32>
      %154 = arith.select %152, %153, %150 : vector<16x128xi1>, vector<16x128xf32>
      %c1_i32_64 = arith.constant 1 : i32
      %155 = tpu.dynamic_rotate %149 by %c1_i32_64 dim 0 : vector<16x128xf32>, i32 -> vector<16x128xf32>
      %cst_65 = arith.constant -1.000000e+30 : f32
      %156 = vector.shape_cast %54 : vector<16x1xi1> to vector<16x1xi1>
      %157 = vector.broadcast %156 : vector<16x1xi1> to vector<16x128xi1>
      %158 = vector.broadcast %cst_65 : f32 to vector<16x128xf32>
      %159 = arith.select %157, %158, %155 : vector<16x128xi1>, vector<16x128xf32>
      %160 = arith.maximumf %154, %149 : vector<16x128xf32>
      %161 = arith.maximumf %160, %159 : vector<16x128xf32>
      %162 = arith.subf %85, %161 : vector<16x128xf32>
      %cst_66 = arith.constant 0.000000e+00 : f32
      %163 = vector.broadcast %cst_66 : f32 to vector<16x128xf32>
      %164 = arith.maximumf %162, %163 : vector<16x128xf32>
      %165 = arith.mulf %112, %164 : vector<16x128xf32>
      %166 = arith.subf %164, %165 : vector<16x128xf32>
      %cst_67 = arith.constant 0.000000e+00 : f32
      %167 = vector.broadcast %cst_67 : f32 to vector<16x128xf32>
      %168 = arith.maximumf %166, %167 : vector<16x128xf32>
      %169 = arith.addf %112, %168 : vector<16x128xf32>
      %c15_i32_68 = arith.constant 15 : i32
      %170 = tpu.dynamic_rotate %137 by %c15_i32_68 dim 0 : vector<16x128xf32>, i32 -> vector<16x128xf32>
      %cst_69 = arith.constant 1.000000e+30 : f32
      %171 = vector.shape_cast %56 : vector<16x1xi1> to vector<16x1xi1>
      %172 = vector.broadcast %171 : vector<16x1xi1> to vector<16x128xi1>
      %173 = vector.broadcast %cst_69 : f32 to vector<16x128xf32>
      %174 = arith.select %172, %173, %170 : vector<16x128xi1>, vector<16x128xf32>
      %c1_i32_70 = arith.constant 1 : i32
      %175 = tpu.dynamic_rotate %137 by %c1_i32_70 dim 0 : vector<16x128xf32>, i32 -> vector<16x128xf32>
      %cst_71 = arith.constant 1.000000e+30 : f32
      %176 = vector.shape_cast %54 : vector<16x1xi1> to vector<16x1xi1>
      %177 = vector.broadcast %176 : vector<16x1xi1> to vector<16x128xi1>
      %178 = vector.broadcast %cst_71 : f32 to vector<16x128xf32>
      %179 = arith.select %177, %178, %175 : vector<16x128xi1>, vector<16x128xf32>
      %180 = arith.minimumf %174, %137 : vector<16x128xf32>
      %181 = arith.minimumf %180, %179 : vector<16x128xf32>
      %c127_i32_72 = arith.constant 127 : i32
      %182 = tpu.dynamic_rotate %137 by %c127_i32_72 dim 1 : vector<16x128xf32>, i32 -> vector<16x128xf32>
      %cst_73 = arith.constant 1.000000e+30 : f32
      %183 = vector.shape_cast %60 : vector<1x128xi1> to vector<1x128xi1>
      %184 = vector.broadcast %183 : vector<1x128xi1> to vector<16x128xi1>
      %185 = vector.broadcast %cst_73 : f32 to vector<16x128xf32>
      %186 = arith.select %184, %185, %182 : vector<16x128xi1>, vector<16x128xf32>
      %c1_i32_74 = arith.constant 1 : i32
      %187 = tpu.dynamic_rotate %137 by %c1_i32_74 dim 1 : vector<16x128xf32>, i32 -> vector<16x128xf32>
      %cst_75 = arith.constant 1.000000e+30 : f32
      %188 = vector.shape_cast %58 : vector<1x128xi1> to vector<1x128xi1>
      %189 = vector.broadcast %188 : vector<1x128xi1> to vector<16x128xi1>
      %190 = vector.broadcast %cst_75 : f32 to vector<16x128xf32>
      %191 = arith.select %189, %190, %187 : vector<16x128xi1>, vector<16x128xf32>
      %192 = arith.minimumf %186, %137 : vector<16x128xf32>
      %193 = arith.minimumf %192, %191 : vector<16x128xf32>
      %194 = arith.minimumf %181, %193 : vector<16x128xf32>
      %c127_i32_76 = arith.constant 127 : i32
      %195 = tpu.dynamic_rotate %194 by %c127_i32_76 dim 1 : vector<16x128xf32>, i32 -> vector<16x128xf32>
      %cst_77 = arith.constant -1.000000e+30 : f32
      %196 = vector.shape_cast %60 : vector<1x128xi1> to vector<1x128xi1>
      %197 = vector.broadcast %196 : vector<1x128xi1> to vector<16x128xi1>
      %198 = vector.broadcast %cst_77 : f32 to vector<16x128xf32>
      %199 = arith.select %197, %198, %195 : vector<16x128xi1>, vector<16x128xf32>
      %c1_i32_78 = arith.constant 1 : i32
      %200 = tpu.dynamic_rotate %194 by %c1_i32_78 dim 1 : vector<16x128xf32>, i32 -> vector<16x128xf32>
      %cst_79 = arith.constant -1.000000e+30 : f32
      %201 = vector.shape_cast %58 : vector<1x128xi1> to vector<1x128xi1>
      %202 = vector.broadcast %201 : vector<1x128xi1> to vector<16x128xi1>
      %203 = vector.broadcast %cst_79 : f32 to vector<16x128xf32>
      %204 = arith.select %202, %203, %200 : vector<16x128xi1>, vector<16x128xf32>
      %205 = arith.maximumf %199, %194 : vector<16x128xf32>
      %206 = arith.maximumf %205, %204 : vector<16x128xf32>
      %c15_i32_80 = arith.constant 15 : i32
      %207 = tpu.dynamic_rotate %206 by %c15_i32_80 dim 0 : vector<16x128xf32>, i32 -> vector<16x128xf32>
      %cst_81 = arith.constant -1.000000e+30 : f32
      %208 = vector.shape_cast %56 : vector<16x1xi1> to vector<16x1xi1>
      %209 = vector.broadcast %208 : vector<16x1xi1> to vector<16x128xi1>
      %210 = vector.broadcast %cst_81 : f32 to vector<16x128xf32>
      %211 = arith.select %209, %210, %207 : vector<16x128xi1>, vector<16x128xf32>
      %c1_i32_82 = arith.constant 1 : i32
      %212 = tpu.dynamic_rotate %206 by %c1_i32_82 dim 0 : vector<16x128xf32>, i32 -> vector<16x128xf32>
      %cst_83 = arith.constant -1.000000e+30 : f32
      %213 = vector.shape_cast %54 : vector<16x1xi1> to vector<16x1xi1>
      %214 = vector.broadcast %213 : vector<16x1xi1> to vector<16x128xi1>
      %215 = vector.broadcast %cst_83 : f32 to vector<16x128xf32>
      %216 = arith.select %214, %215, %212 : vector<16x128xi1>, vector<16x128xf32>
      %217 = arith.maximumf %211, %206 : vector<16x128xf32>
      %218 = arith.maximumf %217, %216 : vector<16x128xf32>
      %219 = arith.subf %137, %218 : vector<16x128xf32>
      %cst_84 = arith.constant 0.000000e+00 : f32
      %220 = vector.broadcast %cst_84 : f32 to vector<16x128xf32>
      %221 = arith.maximumf %219, %220 : vector<16x128xf32>
      %222 = arith.mulf %169, %221 : vector<16x128xf32>
      %223 = arith.subf %221, %222 : vector<16x128xf32>
      %cst_85 = arith.constant 0.000000e+00 : f32
      %224 = vector.broadcast %cst_85 : f32 to vector<16x128xf32>
      %225 = arith.maximumf %223, %224 : vector<16x128xf32>
      %226 = arith.addf %169, %225 : vector<16x128xf32>
      %c15_i32_86 = arith.constant 15 : i32
      %227 = tpu.dynamic_rotate %194 by %c15_i32_86 dim 0 : vector<16x128xf32>, i32 -> vector<16x128xf32>
      %cst_87 = arith.constant 1.000000e+30 : f32
      %228 = vector.shape_cast %56 : vector<16x1xi1> to vector<16x1xi1>
      %229 = vector.broadcast %228 : vector<16x1xi1> to vector<16x128xi1>
      %230 = vector.broadcast %cst_87 : f32 to vector<16x128xf32>
      %231 = arith.select %229, %230, %227 : vector<16x128xi1>, vector<16x128xf32>
      %c1_i32_88 = arith.constant 1 : i32
      %232 = tpu.dynamic_rotate %194 by %c1_i32_88 dim 0 : vector<16x128xf32>, i32 -> vector<16x128xf32>
      %cst_89 = arith.constant 1.000000e+30 : f32
      %233 = vector.shape_cast %54 : vector<16x1xi1> to vector<16x1xi1>
      %234 = vector.broadcast %233 : vector<16x1xi1> to vector<16x128xi1>
      %235 = vector.broadcast %cst_89 : f32 to vector<16x128xf32>
      %236 = arith.select %234, %235, %232 : vector<16x128xi1>, vector<16x128xf32>
      %237 = arith.minimumf %231, %194 : vector<16x128xf32>
      %238 = arith.minimumf %237, %236 : vector<16x128xf32>
      %c127_i32_90 = arith.constant 127 : i32
      %239 = tpu.dynamic_rotate %194 by %c127_i32_90 dim 1 : vector<16x128xf32>, i32 -> vector<16x128xf32>
      %cst_91 = arith.constant 1.000000e+30 : f32
      %240 = vector.shape_cast %60 : vector<1x128xi1> to vector<1x128xi1>
      %241 = vector.broadcast %240 : vector<1x128xi1> to vector<16x128xi1>
      %242 = vector.broadcast %cst_91 : f32 to vector<16x128xf32>
      %243 = arith.select %241, %242, %239 : vector<16x128xi1>, vector<16x128xf32>
      %c1_i32_92 = arith.constant 1 : i32
      %244 = tpu.dynamic_rotate %194 by %c1_i32_92 dim 1 : vector<16x128xf32>, i32 -> vector<16x128xf32>
      %cst_93 = arith.constant 1.000000e+30 : f32
      %245 = vector.shape_cast %58 : vector<1x128xi1> to vector<1x128xi1>
      %246 = vector.broadcast %245 : vector<1x128xi1> to vector<16x128xi1>
      %247 = vector.broadcast %cst_93 : f32 to vector<16x128xf32>
      %248 = arith.select %246, %247, %244 : vector<16x128xi1>, vector<16x128xf32>
      %249 = arith.minimumf %243, %194 : vector<16x128xf32>
      %250 = arith.minimumf %249, %248 : vector<16x128xf32>
      %251 = arith.minimumf %238, %250 : vector<16x128xf32>
      %c127_i32_94 = arith.constant 127 : i32
      %252 = tpu.dynamic_rotate %251 by %c127_i32_94 dim 1 : vector<16x128xf32>, i32 -> vector<16x128xf32>
      %cst_95 = arith.constant -1.000000e+30 : f32
      %253 = vector.shape_cast %60 : vector<1x128xi1> to vector<1x128xi1>
      %254 = vector.broadcast %253 : vector<1x128xi1> to vector<16x128xi1>
      %255 = vector.broadcast %cst_95 : f32 to vector<16x128xf32>
      %256 = arith.select %254, %255, %252 : vector<16x128xi1>, vector<16x128xf32>
      %c1_i32_96 = arith.constant 1 : i32
      %257 = tpu.dynamic_rotate %251 by %c1_i32_96 dim 1 : vector<16x128xf32>, i32 -> vector<16x128xf32>
      %cst_97 = arith.constant -1.000000e+30 : f32
      %258 = vector.shape_cast %58 : vector<1x128xi1> to vector<1x128xi1>
      %259 = vector.broadcast %258 : vector<1x128xi1> to vector<16x128xi1>
      %260 = vector.broadcast %cst_97 : f32 to vector<16x128xf32>
      %261 = arith.select %259, %260, %257 : vector<16x128xi1>, vector<16x128xf32>
      %262 = arith.maximumf %256, %251 : vector<16x128xf32>
      %263 = arith.maximumf %262, %261 : vector<16x128xf32>
      %c15_i32_98 = arith.constant 15 : i32
      %264 = tpu.dynamic_rotate %263 by %c15_i32_98 dim 0 : vector<16x128xf32>, i32 -> vector<16x128xf32>
      %cst_99 = arith.constant -1.000000e+30 : f32
      %265 = vector.shape_cast %56 : vector<16x1xi1> to vector<16x1xi1>
      %266 = vector.broadcast %265 : vector<16x1xi1> to vector<16x128xi1>
      %267 = vector.broadcast %cst_99 : f32 to vector<16x128xf32>
      %268 = arith.select %266, %267, %264 : vector<16x128xi1>, vector<16x128xf32>
      %c1_i32_100 = arith.constant 1 : i32
      %269 = tpu.dynamic_rotate %263 by %c1_i32_100 dim 0 : vector<16x128xf32>, i32 -> vector<16x128xf32>
      %cst_101 = arith.constant -1.000000e+30 : f32
      %270 = vector.shape_cast %54 : vector<16x1xi1> to vector<16x1xi1>
      %271 = vector.broadcast %270 : vector<16x1xi1> to vector<16x128xi1>
      %272 = vector.broadcast %cst_101 : f32 to vector<16x128xf32>
      %273 = arith.select %271, %272, %269 : vector<16x128xi1>, vector<16x128xf32>
      %274 = arith.maximumf %268, %263 : vector<16x128xf32>
      %275 = arith.maximumf %274, %273 : vector<16x128xf32>
      %276 = arith.subf %194, %275 : vector<16x128xf32>
      %cst_102 = arith.constant 0.000000e+00 : f32
      %277 = vector.broadcast %cst_102 : f32 to vector<16x128xf32>
      %278 = arith.maximumf %276, %277 : vector<16x128xf32>
      %279 = arith.mulf %226, %278 : vector<16x128xf32>
      %280 = arith.subf %278, %279 : vector<16x128xf32>
      %cst_103 = arith.constant 0.000000e+00 : f32
      %281 = vector.broadcast %cst_103 : f32 to vector<16x128xf32>
      %282 = arith.maximumf %280, %281 : vector<16x128xf32>
      %283 = arith.addf %226, %282 : vector<16x128xf32>
      %284 = arith.mulf %283, %3 : vector<16x128xf32>
      %cst_104 = arith.constant dense<0.000000e+00> : vector<128xf32>
      %285 = vector.multi_reduction <add>, %284, %cst_104 [0] : vector<16x128xf32> to vector<128xf32>
      %286 = vector.shape_cast %285 : vector<128xf32> to vector<1x128xf32>
      %c0_105 = arith.constant 0 : index
      %c0_106 = arith.constant 0 : index
      %c4 = arith.constant 4 : index
      %c0_107 = arith.constant 0 : index
      %287 = vector.load %arg4[%c0_105, %c0_106, %c4, %c0_107] : memref<1x1x8x128xf32, #tpu.memory_space<vmem>>, vector<1x1x1x128xf32>
      %288 = vector.shape_cast %287 : vector<1x1x1x128xf32> to vector<1x128xf32>
      %289 = vector.shape_cast %286 : vector<1x128xf32> to vector<1x1x1x128xf32>
      tpu.vector_store %arg4[%c0_105, %c0_106, %c4, %c0_107], %289 {strides = array<i32>} : memref<1x1x8x128xf32, #tpu.memory_space<vmem>>, vector<1x1x1x128xf32>,
      %cst_108 = arith.constant dense<0.000000e+00> : vector<128xf32>
      %290 = vector.multi_reduction <add>, %283, %cst_108 [0] : vector<16x128xf32> to vector<128xf32>
      %291 = vector.shape_cast %290 : vector<128xf32> to vector<1x128xf32>
      %c0_109 = arith.constant 0 : index
      %c0_110 = arith.constant 0 : index
      %c5 = arith.constant 5 : index
      %c0_111 = arith.constant 0 : index
      %292 = vector.load %arg4[%c0_109, %c0_110, %c5, %c0_111] : memref<1x1x8x128xf32, #tpu.memory_space<vmem>>, vector<1x1x1x128xf32>
      %293 = vector.shape_cast %292 : vector<1x1x1x128xf32> to vector<1x128xf32>
      %294 = vector.shape_cast %291 : vector<1x128xf32> to vector<1x1x1x128xf32>
      tpu.vector_store %arg4[%c0_109, %c0_110, %c5, %c0_111], %294 {strides = array<i32>} : memref<1x1x8x128xf32, #tpu.memory_space<vmem>>, vector<1x1x1x128xf32>,
      %c15_i32_112 = arith.constant 15 : i32
      %295 = tpu.dynamic_rotate %3 by %c15_i32_112 dim 0 : vector<16x128xf32>, i32 -> vector<16x128xf32>
      %cst_113 = arith.constant 1.000000e+30 : f32
      %296 = vector.shape_cast %56 : vector<16x1xi1> to vector<16x1xi1>
      %297 = vector.broadcast %296 : vector<16x1xi1> to vector<16x128xi1>
      %298 = vector.broadcast %cst_113 : f32 to vector<16x128xf32>
      %299 = arith.select %297, %298, %295 : vector<16x128xi1>, vector<16x128xf32>
      %c1_i32_114 = arith.constant 1 : i32
      %300 = tpu.dynamic_rotate %3 by %c1_i32_114 dim 0 : vector<16x128xf32>, i32 -> vector<16x128xf32>
      %cst_115 = arith.constant 1.000000e+30 : f32
      %301 = vector.shape_cast %54 : vector<16x1xi1> to vector<16x1xi1>
      %302 = vector.broadcast %301 : vector<16x1xi1> to vector<16x128xi1>
      %303 = vector.broadcast %cst_115 : f32 to vector<16x128xf32>
      %304 = arith.select %302, %303, %300 : vector<16x128xi1>, vector<16x128xf32>
      %305 = arith.minimumf %299, %3 : vector<16x128xf32>
      %306 = arith.minimumf %305, %304 : vector<16x128xf32>
      %c127_i32_116 = arith.constant 127 : i32
      %307 = tpu.dynamic_rotate %3 by %c127_i32_116 dim 1 : vector<16x128xf32>, i32 -> vector<16x128xf32>
      %cst_117 = arith.constant 1.000000e+30 : f32
      %308 = vector.shape_cast %60 : vector<1x128xi1> to vector<1x128xi1>
      %309 = vector.broadcast %308 : vector<1x128xi1> to vector<16x128xi1>
      %310 = vector.broadcast %cst_117 : f32 to vector<16x128xf32>
      %311 = arith.select %309, %310, %307 : vector<16x128xi1>, vector<16x128xf32>
      %c1_i32_118 = arith.constant 1 : i32
      %312 = tpu.dynamic_rotate %3 by %c1_i32_118 dim 1 : vector<16x128xf32>, i32 -> vector<16x128xf32>
      %cst_119 = arith.constant 1.000000e+30 : f32
      %313 = vector.shape_cast %58 : vector<1x128xi1> to vector<1x128xi1>
      %314 = vector.broadcast %313 : vector<1x128xi1> to vector<16x128xi1>
      %315 = vector.broadcast %cst_119 : f32 to vector<16x128xf32>
      %316 = arith.select %314, %315, %312 : vector<16x128xi1>, vector<16x128xf32>
      %317 = arith.minimumf %311, %3 : vector<16x128xf32>
      %318 = arith.minimumf %317, %316 : vector<16x128xf32>
      %319 = arith.minimumf %306, %318 : vector<16x128xf32>
      %c127_i32_120 = arith.constant 127 : i32
      %320 = tpu.dynamic_rotate %319 by %c127_i32_120 dim 1 : vector<16x128xf32>, i32 -> vector<16x128xf32>
      %cst_121 = arith.constant -1.000000e+30 : f32
      %321 = vector.shape_cast %60 : vector<1x128xi1> to vector<1x128xi1>
      %322 = vector.broadcast %321 : vector<1x128xi1> to vector<16x128xi1>
      %323 = vector.broadcast %cst_121 : f32 to vector<16x128xf32>
      %324 = arith.select %322, %323, %320 : vector<16x128xi1>, vector<16x128xf32>
      %c1_i32_122 = arith.constant 1 : i32
      %325 = tpu.dynamic_rotate %319 by %c1_i32_122 dim 1 : vector<16x128xf32>, i32 -> vector<16x128xf32>
      %cst_123 = arith.constant -1.000000e+30 : f32
      %326 = vector.shape_cast %58 : vector<1x128xi1> to vector<1x128xi1>
      %327 = vector.broadcast %326 : vector<1x128xi1> to vector<16x128xi1>
      %328 = vector.broadcast %cst_123 : f32 to vector<16x128xf32>
      %329 = arith.select %327, %328, %325 : vector<16x128xi1>, vector<16x128xf32>
      %330 = arith.maximumf %324, %319 : vector<16x128xf32>
      %331 = arith.maximumf %330, %329 : vector<16x128xf32>
      %c15_i32_124 = arith.constant 15 : i32
      %332 = tpu.dynamic_rotate %331 by %c15_i32_124 dim 0 : vector<16x128xf32>, i32 -> vector<16x128xf32>
      %cst_125 = arith.constant -1.000000e+30 : f32
      %333 = vector.shape_cast %56 : vector<16x1xi1> to vector<16x1xi1>
      %334 = vector.broadcast %333 : vector<16x1xi1> to vector<16x128xi1>
      %335 = vector.broadcast %cst_125 : f32 to vector<16x128xf32>
      %336 = arith.select %334, %335, %332 : vector<16x128xi1>, vector<16x128xf32>
      %c1_i32_126 = arith.constant 1 : i32
      %337 = tpu.dynamic_rotate %331 by %c1_i32_126 dim 0 : vector<16x128xf32>, i32 -> vector<16x128xf32>
      %cst_127 = arith.constant -1.000000e+30 : f32
      %338 = vector.shape_cast %54 : vector<16x1xi1> to vector<16x1xi1>
      %339 = vector.broadcast %338 : vector<16x1xi1> to vector<16x128xi1>
      %340 = vector.broadcast %cst_127 : f32 to vector<16x128xf32>
      %341 = arith.select %339, %340, %337 : vector<16x128xi1>, vector<16x128xf32>
      %342 = arith.maximumf %336, %331 : vector<16x128xf32>
      %343 = arith.maximumf %342, %341 : vector<16x128xf32>
      %344 = arith.subf %3, %343 : vector<16x128xf32>
      %cst_128 = arith.constant 0.000000e+00 : f32
      %345 = vector.broadcast %cst_128 : f32 to vector<16x128xf32>
      %346 = arith.maximumf %344, %345 : vector<16x128xf32>
      %c15_i32_129 = arith.constant 15 : i32
      %347 = tpu.dynamic_rotate %319 by %c15_i32_129 dim 0 : vector<16x128xf32>, i32 -> vector<16x128xf32>
      %cst_130 = arith.constant 1.000000e+30 : f32
      %348 = vector.shape_cast %56 : vector<16x1xi1> to vector<16x1xi1>
      %349 = vector.broadcast %348 : vector<16x1xi1> to vector<16x128xi1>
      %350 = vector.broadcast %cst_130 : f32 to vector<16x128xf32>
      %351 = arith.select %349, %350, %347 : vector<16x128xi1>, vector<16x128xf32>
      %c1_i32_131 = arith.constant 1 : i32
      %352 = tpu.dynamic_rotate %319 by %c1_i32_131 dim 0 : vector<16x128xf32>, i32 -> vector<16x128xf32>
      %cst_132 = arith.constant 1.000000e+30 : f32
      %353 = vector.shape_cast %54 : vector<16x1xi1> to vector<16x1xi1>
      %354 = vector.broadcast %353 : vector<16x1xi1> to vector<16x128xi1>
      %355 = vector.broadcast %cst_132 : f32 to vector<16x128xf32>
      %356 = arith.select %354, %355, %352 : vector<16x128xi1>, vector<16x128xf32>
      %357 = arith.minimumf %351, %319 : vector<16x128xf32>
      %358 = arith.minimumf %357, %356 : vector<16x128xf32>
      %c127_i32_133 = arith.constant 127 : i32
      %359 = tpu.dynamic_rotate %319 by %c127_i32_133 dim 1 : vector<16x128xf32>, i32 -> vector<16x128xf32>
      %cst_134 = arith.constant 1.000000e+30 : f32
      %360 = vector.shape_cast %60 : vector<1x128xi1> to vector<1x128xi1>
      %361 = vector.broadcast %360 : vector<1x128xi1> to vector<16x128xi1>
      %362 = vector.broadcast %cst_134 : f32 to vector<16x128xf32>
      %363 = arith.select %361, %362, %359 : vector<16x128xi1>, vector<16x128xf32>
      %c1_i32_135 = arith.constant 1 : i32
      %364 = tpu.dynamic_rotate %319 by %c1_i32_135 dim 1 : vector<16x128xf32>, i32 -> vector<16x128xf32>
      %cst_136 = arith.constant 1.000000e+30 : f32
      %365 = vector.shape_cast %58 : vector<1x128xi1> to vector<1x128xi1>
      %366 = vector.broadcast %365 : vector<1x128xi1> to vector<16x128xi1>
      %367 = vector.broadcast %cst_136 : f32 to vector<16x128xf32>
      %368 = arith.select %366, %367, %364 : vector<16x128xi1>, vector<16x128xf32>
      %369 = arith.minimumf %363, %319 : vector<16x128xf32>
      %370 = arith.minimumf %369, %368 : vector<16x128xf32>
      %371 = arith.minimumf %358, %370 : vector<16x128xf32>
      %c127_i32_137 = arith.constant 127 : i32
      %372 = tpu.dynamic_rotate %371 by %c127_i32_137 dim 1 : vector<16x128xf32>, i32 -> vector<16x128xf32>
      %cst_138 = arith.constant -1.000000e+30 : f32
      %373 = vector.shape_cast %60 : vector<1x128xi1> to vector<1x128xi1>
      %374 = vector.broadcast %373 : vector<1x128xi1> to vector<16x128xi1>
      %375 = vector.broadcast %cst_138 : f32 to vector<16x128xf32>
      %376 = arith.select %374, %375, %372 : vector<16x128xi1>, vector<16x128xf32>
      %c1_i32_139 = arith.constant 1 : i32
      %377 = tpu.dynamic_rotate %371 by %c1_i32_139 dim 1 : vector<16x128xf32>, i32 -> vector<16x128xf32>
      %cst_140 = arith.constant -1.000000e+30 : f32
      %378 = vector.shape_cast %58 : vector<1x128xi1> to vector<1x128xi1>
      %379 = vector.broadcast %378 : vector<1x128xi1> to vector<16x128xi1>
      %380 = vector.broadcast %cst_140 : f32 to vector<16x128xf32>
      %381 = arith.select %379, %380, %377 : vector<16x128xi1>, vector<16x128xf32>
      %382 = arith.maximumf %376, %371 : vector<16x128xf32>
      %383 = arith.maximumf %382, %381 : vector<16x128xf32>
      %c15_i32_141 = arith.constant 15 : i32
      %384 = tpu.dynamic_rotate %383 by %c15_i32_141 dim 0 : vector<16x128xf32>, i32 -> vector<16x128xf32>
      %cst_142 = arith.constant -1.000000e+30 : f32
      %385 = vector.shape_cast %56 : vector<16x1xi1> to vector<16x1xi1>
      %386 = vector.broadcast %385 : vector<16x1xi1> to vector<16x128xi1>
      %387 = vector.broadcast %cst_142 : f32 to vector<16x128xf32>
      %388 = arith.select %386, %387, %384 : vector<16x128xi1>, vector<16x128xf32>
      %c1_i32_143 = arith.constant 1 : i32
      %389 = tpu.dynamic_rotate %383 by %c1_i32_143 dim 0 : vector<16x128xf32>, i32 -> vector<16x128xf32>
      %cst_144 = arith.constant -1.000000e+30 : f32
      %390 = vector.shape_cast %54 : vector<16x1xi1> to vector<16x1xi1>
      %391 = vector.broadcast %390 : vector<16x1xi1> to vector<16x128xi1>
      %392 = vector.broadcast %cst_144 : f32 to vector<16x128xf32>
      %393 = arith.select %391, %392, %389 : vector<16x128xi1>, vector<16x128xf32>
      %394 = arith.maximumf %388, %383 : vector<16x128xf32>
      %395 = arith.maximumf %394, %393 : vector<16x128xf32>
      %396 = arith.subf %319, %395 : vector<16x128xf32>
      %cst_145 = arith.constant 0.000000e+00 : f32
      %397 = vector.broadcast %cst_145 : f32 to vector<16x128xf32>
      %398 = arith.maximumf %396, %397 : vector<16x128xf32>
      %399 = arith.mulf %346, %398 : vector<16x128xf32>
      %400 = arith.subf %398, %399 : vector<16x128xf32>
      %cst_146 = arith.constant 0.000000e+00 : f32
      %401 = vector.broadcast %cst_146 : f32 to vector<16x128xf32>
      %402 = arith.maximumf %400, %401 : vector<16x128xf32>
      %403 = arith.addf %346, %402 : vector<16x128xf32>
      %c15_i32_147 = arith.constant 15 : i32
      %404 = tpu.dynamic_rotate %371 by %c15_i32_147 dim 0 : vector<16x128xf32>, i32 -> vector<16x128xf32>
      %cst_148 = arith.constant 1.000000e+30 : f32
      %405 = vector.shape_cast %56 : vector<16x1xi1> to vector<16x1xi1>
      %406 = vector.broadcast %405 : vector<16x1xi1> to vector<16x128xi1>
      %407 = vector.broadcast %cst_148 : f32 to vector<16x128xf32>
      %408 = arith.select %406, %407, %404 : vector<16x128xi1>, vector<16x128xf32>
      %c1_i32_149 = arith.constant 1 : i32
      %409 = tpu.dynamic_rotate %371 by %c1_i32_149 dim 0 : vector<16x128xf32>, i32 -> vector<16x128xf32>
      %cst_150 = arith.constant 1.000000e+30 : f32
      %410 = vector.shape_cast %54 : vector<16x1xi1> to vector<16x1xi1>
      %411 = vector.broadcast %410 : vector<16x1xi1> to vector<16x128xi1>
      %412 = vector.broadcast %cst_150 : f32 to vector<16x128xf32>
      %413 = arith.select %411, %412, %409 : vector<16x128xi1>, vector<16x128xf32>
      %414 = arith.minimumf %408, %371 : vector<16x128xf32>
      %415 = arith.minimumf %414, %413 : vector<16x128xf32>
      %c127_i32_151 = arith.constant 127 : i32
      %416 = tpu.dynamic_rotate %371 by %c127_i32_151 dim 1 : vector<16x128xf32>, i32 -> vector<16x128xf32>
      %cst_152 = arith.constant 1.000000e+30 : f32
      %417 = vector.shape_cast %60 : vector<1x128xi1> to vector<1x128xi1>
      %418 = vector.broadcast %417 : vector<1x128xi1> to vector<16x128xi1>
      %419 = vector.broadcast %cst_152 : f32 to vector<16x128xf32>
      %420 = arith.select %418, %419, %416 : vector<16x128xi1>, vector<16x128xf32>
      %c1_i32_153 = arith.constant 1 : i32
      %421 = tpu.dynamic_rotate %371 by %c1_i32_153 dim 1 : vector<16x128xf32>, i32 -> vector<16x128xf32>
      %cst_154 = arith.constant 1.000000e+30 : f32
      %422 = vector.shape_cast %58 : vector<1x128xi1> to vector<1x128xi1>
      %423 = vector.broadcast %422 : vector<1x128xi1> to vector<16x128xi1>
      %424 = vector.broadcast %cst_154 : f32 to vector<16x128xf32>
      %425 = arith.select %423, %424, %421 : vector<16x128xi1>, vector<16x128xf32>
      %426 = arith.minimumf %420, %371 : vector<16x128xf32>
      %427 = arith.minimumf %426, %425 : vector<16x128xf32>
      %428 = arith.minimumf %415, %427 : vector<16x128xf32>
      %c127_i32_155 = arith.constant 127 : i32
      %429 = tpu.dynamic_rotate %428 by %c127_i32_155 dim 1 : vector<16x128xf32>, i32 -> vector<16x128xf32>
      %cst_156 = arith.constant -1.000000e+30 : f32
      %430 = vector.shape_cast %60 : vector<1x128xi1> to vector<1x128xi1>
      %431 = vector.broadcast %430 : vector<1x128xi1> to vector<16x128xi1>
      %432 = vector.broadcast %cst_156 : f32 to vector<16x128xf32>
      %433 = arith.select %431, %432, %429 : vector<16x128xi1>, vector<16x128xf32>
      %c1_i32_157 = arith.constant 1 : i32
      %434 = tpu.dynamic_rotate %428 by %c1_i32_157 dim 1 : vector<16x128xf32>, i32 -> vector<16x128xf32>
      %cst_158 = arith.constant -1.000000e+30 : f32
      %435 = vector.shape_cast %58 : vector<1x128xi1> to vector<1x128xi1>
      %436 = vector.broadcast %435 : vector<1x128xi1> to vector<16x128xi1>
      %437 = vector.broadcast %cst_158 : f32 to vector<16x128xf32>
      %438 = arith.select %436, %437, %434 : vector<16x128xi1>, vector<16x128xf32>
      %439 = arith.maximumf %433, %428 : vector<16x128xf32>
      %440 = arith.maximumf %439, %438 : vector<16x128xf32>
      %c15_i32_159 = arith.constant 15 : i32
      %441 = tpu.dynamic_rotate %440 by %c15_i32_159 dim 0 : vector<16x128xf32>, i32 -> vector<16x128xf32>
      %cst_160 = arith.constant -1.000000e+30 : f32
      %442 = vector.shape_cast %56 : vector<16x1xi1> to vector<16x1xi1>
      %443 = vector.broadcast %442 : vector<16x1xi1> to vector<16x128xi1>
      %444 = vector.broadcast %cst_160 : f32 to vector<16x128xf32>
      %445 = arith.select %443, %444, %441 : vector<16x128xi1>, vector<16x128xf32>
      %c1_i32_161 = arith.constant 1 : i32
      %446 = tpu.dynamic_rotate %440 by %c1_i32_161 dim 0 : vector<16x128xf32>, i32 -> vector<16x128xf32>
      %cst_162 = arith.constant -1.000000e+30 : f32
      %447 = vector.shape_cast %54 : vector<16x1xi1> to vector<16x1xi1>
      %448 = vector.broadcast %447 : vector<16x1xi1> to vector<16x128xi1>
      %449 = vector.broadcast %cst_162 : f32 to vector<16x128xf32>
      %450 = arith.select %448, %449, %446 : vector<16x128xi1>, vector<16x128xf32>
      %451 = arith.maximumf %445, %440 : vector<16x128xf32>
      %452 = arith.maximumf %451, %450 : vector<16x128xf32>
      %453 = arith.subf %371, %452 : vector<16x128xf32>
      %cst_163 = arith.constant 0.000000e+00 : f32
      %454 = vector.broadcast %cst_163 : f32 to vector<16x128xf32>
      %455 = arith.maximumf %453, %454 : vector<16x128xf32>
      %456 = arith.mulf %403, %455 : vector<16x128xf32>
      %457 = arith.subf %455, %456 : vector<16x128xf32>
      %cst_164 = arith.constant 0.000000e+00 : f32
      %458 = vector.broadcast %cst_164 : f32 to vector<16x128xf32>
      %459 = arith.maximumf %457, %458 : vector<16x128xf32>
      %460 = arith.addf %403, %459 : vector<16x128xf32>
      %c15_i32_165 = arith.constant 15 : i32
      %461 = tpu.dynamic_rotate %428 by %c15_i32_165 dim 0 : vector<16x128xf32>, i32 -> vector<16x128xf32>
      %cst_166 = arith.constant 1.000000e+30 : f32
      %462 = vector.shape_cast %56 : vector<16x1xi1> to vector<16x1xi1>
      %463 = vector.broadcast %462 : vector<16x1xi1> to vector<16x128xi1>
      %464 = vector.broadcast %cst_166 : f32 to vector<16x128xf32>
      %465 = arith.select %463, %464, %461 : vector<16x128xi1>, vector<16x128xf32>
      %c1_i32_167 = arith.constant 1 : i32
      %466 = tpu.dynamic_rotate %428 by %c1_i32_167 dim 0 : vector<16x128xf32>, i32 -> vector<16x128xf32>
      %cst_168 = arith.constant 1.000000e+30 : f32
      %467 = vector.shape_cast %54 : vector<16x1xi1> to vector<16x1xi1>
      %468 = vector.broadcast %467 : vector<16x1xi1> to vector<16x128xi1>
      %469 = vector.broadcast %cst_168 : f32 to vector<16x128xf32>
      %470 = arith.select %468, %469, %466 : vector<16x128xi1>, vector<16x128xf32>
      %471 = arith.minimumf %465, %428 : vector<16x128xf32>
      %472 = arith.minimumf %471, %470 : vector<16x128xf32>
      %c127_i32_169 = arith.constant 127 : i32
      %473 = tpu.dynamic_rotate %428 by %c127_i32_169 dim 1 : vector<16x128xf32>, i32 -> vector<16x128xf32>
      %cst_170 = arith.constant 1.000000e+30 : f32
      %474 = vector.shape_cast %60 : vector<1x128xi1> to vector<1x128xi1>
      %475 = vector.broadcast %474 : vector<1x128xi1> to vector<16x128xi1>
      %476 = vector.broadcast %cst_170 : f32 to vector<16x128xf32>
      %477 = arith.select %475, %476, %473 : vector<16x128xi1>, vector<16x128xf32>
      %c1_i32_171 = arith.constant 1 : i32
      %478 = tpu.dynamic_rotate %428 by %c1_i32_171 dim 1 : vector<16x128xf32>, i32 -> vector<16x128xf32>
      %cst_172 = arith.constant 1.000000e+30 : f32
      %479 = vector.shape_cast %58 : vector<1x128xi1> to vector<1x128xi1>
      %480 = vector.broadcast %479 : vector<1x128xi1> to vector<16x128xi1>
      %481 = vector.broadcast %cst_172 : f32 to vector<16x128xf32>
      %482 = arith.select %480, %481, %478 : vector<16x128xi1>, vector<16x128xf32>
      %483 = arith.minimumf %477, %428 : vector<16x128xf32>
      %484 = arith.minimumf %483, %482 : vector<16x128xf32>
      %485 = arith.minimumf %472, %484 : vector<16x128xf32>
      %c127_i32_173 = arith.constant 127 : i32
      %486 = tpu.dynamic_rotate %485 by %c127_i32_173 dim 1 : vector<16x128xf32>, i32 -> vector<16x128xf32>
      %cst_174 = arith.constant -1.000000e+30 : f32
      %487 = vector.shape_cast %60 : vector<1x128xi1> to vector<1x128xi1>
      %488 = vector.broadcast %487 : vector<1x128xi1> to vector<16x128xi1>
      %489 = vector.broadcast %cst_174 : f32 to vector<16x128xf32>
      %490 = arith.select %488, %489, %486 : vector<16x128xi1>, vector<16x128xf32>
      %c1_i32_175 = arith.constant 1 : i32
      %491 = tpu.dynamic_rotate %485 by %c1_i32_175 dim 1 : vector<16x128xf32>, i32 -> vector<16x128xf32>
      %cst_176 = arith.constant -1.000000e+30 : f32
      %492 = vector.shape_cast %58 : vector<1x128xi1> to vector<1x128xi1>
      %493 = vector.broadcast %492 : vector<1x128xi1> to vector<16x128xi1>
      %494 = vector.broadcast %cst_176 : f32 to vector<16x128xf32>
      %495 = arith.select %493, %494, %491 : vector<16x128xi1>, vector<16x128xf32>
      %496 = arith.maximumf %490, %485 : vector<16x128xf32>
      %497 = arith.maximumf %496, %495 : vector<16x128xf32>
      %c15_i32_177 = arith.constant 15 : i32
      %498 = tpu.dynamic_rotate %497 by %c15_i32_177 dim 0 : vector<16x128xf32>, i32 -> vector<16x128xf32>
      %cst_178 = arith.constant -1.000000e+30 : f32
      %499 = vector.shape_cast %56 : vector<16x1xi1> to vector<16x1xi1>
      %500 = vector.broadcast %499 : vector<16x1xi1> to vector<16x128xi1>
      %501 = vector.broadcast %cst_178 : f32 to vector<16x128xf32>
      %502 = arith.select %500, %501, %498 : vector<16x128xi1>, vector<16x128xf32>
      %c1_i32_179 = arith.constant 1 : i32
      %503 = tpu.dynamic_rotate %497 by %c1_i32_179 dim 0 : vector<16x128xf32>, i32 -> vector<16x128xf32>
      %cst_180 = arith.constant -1.000000e+30 : f32
      %504 = vector.shape_cast %54 : vector<16x1xi1> to vector<16x1xi1>
      %505 = vector.broadcast %504 : vector<16x1xi1> to vector<16x128xi1>
      %506 = vector.broadcast %cst_180 : f32 to vector<16x128xf32>
      %507 = arith.select %505, %506, %503 : vector<16x128xi1>, vector<16x128xf32>
      %508 = arith.maximumf %502, %497 : vector<16x128xf32>
      %509 = arith.maximumf %508, %507 : vector<16x128xf32>
      %510 = arith.subf %428, %509 : vector<16x128xf32>
      %cst_181 = arith.constant 0.000000e+00 : f32
      %511 = vector.broadcast %cst_181 : f32 to vector<16x128xf32>
      %512 = arith.maximumf %510, %511 : vector<16x128xf32>
      %513 = arith.mulf %460, %512 : vector<16x128xf32>
      %514 = arith.subf %512, %513 : vector<16x128xf32>
      %cst_182 = arith.constant 0.000000e+00 : f32
      %515 = vector.broadcast %cst_182 : f32 to vector<16x128xf32>
      %516 = arith.maximumf %514, %515 : vector<16x128xf32>
      %517 = arith.addf %460, %516 : vector<16x128xf32>
      %518 = arith.mulf %517, %23 : vector<16x128xf32>
      %cst_183 = arith.constant dense<0.000000e+00> : vector<128xf32>
      %519 = vector.multi_reduction <add>, %518, %cst_183 [0] : vector<16x128xf32> to vector<128xf32>
      %520 = vector.shape_cast %519 : vector<128xf32> to vector<1x128xf32>
      %c0_184 = arith.constant 0 : index
      %c0_185 = arith.constant 0 : index
      %c6 = arith.constant 6 : index
      %c0_186 = arith.constant 0 : index
      %521 = vector.load %arg4[%c0_184, %c0_185, %c6, %c0_186] : memref<1x1x8x128xf32, #tpu.memory_space<vmem>>, vector<1x1x1x128xf32>
      %522 = vector.shape_cast %521 : vector<1x1x1x128xf32> to vector<1x128xf32>
      %523 = vector.shape_cast %520 : vector<1x128xf32> to vector<1x1x1x128xf32>
      tpu.vector_store %arg4[%c0_184, %c0_185, %c6, %c0_186], %523 {strides = array<i32>} : memref<1x1x8x128xf32, #tpu.memory_space<vmem>>, vector<1x1x1x128xf32>,
      %cst_187 = arith.constant dense<0.000000e+00> : vector<128xf32>
      %524 = vector.multi_reduction <add>, %517, %cst_187 [0] : vector<16x128xf32> to vector<128xf32>
      %525 = vector.shape_cast %524 : vector<128xf32> to vector<1x128xf32>
      %c0_188 = arith.constant 0 : index
      %c0_189 = arith.constant 0 : index
      %c7 = arith.constant 7 : index
      %c0_190 = arith.constant 0 : index
      %526 = vector.load %arg4[%c0_188, %c0_189, %c7, %c0_190] : memref<1x1x8x128xf32, #tpu.memory_space<vmem>>, vector<1x1x1x128xf32>
      %527 = vector.shape_cast %526 : vector<1x1x1x128xf32> to vector<1x128xf32>
      %528 = vector.shape_cast %525 : vector<1x128xf32> to vector<1x1x1x128xf32>
      tpu.vector_store %arg4[%c0_188, %c0_189, %c7, %c0_190], %528 {strides = array<i32>} : memref<1x1x8x128xf32, #tpu.memory_space<vmem>>, vector<1x1x1x128xf32>,
    } else {
    }
    return
  }
  func.func @transform_0(%arg0: i32, %arg1: i32) -> (i32, i32, i32, i32) {
    %c0_i32 = arith.constant 0 : i32
    %c0_i32_0 = arith.constant 0 : i32
    %c0_i32_1 = arith.constant 0 : i32
    return %arg0, %arg1, %c0_i32, %c0_i32_0 : i32, i32, i32, i32
  }
  func.func @transform_1(%arg0: i32, %arg1: i32) -> (i32, i32, i32, i32) {
    %c0_i32 = arith.constant 0 : i32
    %c0_i32_0 = arith.constant 0 : i32
    %c0_i32_1 = arith.constant 0 : i32
    return %arg0, %arg1, %c0_i32, %c0_i32_0 : i32, i32, i32, i32
  }
  func.func @transform_2(%arg0: i32, %arg1: i32) -> (i32, i32, i32, i32) {
    %c0_i32 = arith.constant 0 : i32
    %c0_i32_0 = arith.constant 0 : i32
    %c0_i32_1 = arith.constant 0 : i32
    return %arg0, %arg1, %c0_i32, %c0_i32_0 : i32, i32, i32, i32
  }
}

</mosaic_0001>

<llo_original>
// kernel: tpu_custom_call.1
$region0: #{tpu_custom_call.1}
  #allocation0 [shape = 'u32[]', space=smem, size = 0x4, offset = 0x4, fixed_abs, tag = 'smem constant byte address 0x4 - core index']
  #allocation1 [shape = 'u32[72,128]{1,0:T(1,128)}', space=vmem, size = 0x9000, scoped, tag = 'internal scratch']
  %s0 = inlined_call_operand.hbm [shape: f32[2,2,16,128], index: 0, kind: input, shape index: {}]
  %s1 = inlined_call_operand.hbm [shape: f32[2,2,16,128], index: 1, kind: input, shape index: {}]
  %s2 = inlined_call_operand.hbm [shape: f32[2,2,8,128], index: 2, kind: output, shape index: {}]
  %s3 = sld [smem:[#allocation0]]
  $region57: #{tpu_custom_call.1} parent=0
    _
  %s5 = ssub.s32 1, %s3
  %s6 = scalar_select 0, %s5, %s3
  $region1: #{tpu_custom_call.1} parent=0
    #allocation2 [shape = 'u8[16384]{0}', space=vmem, size = 0x4000, scoped, tag = 'input window, operand 0']
    #allocation3 [shape = 's32[2]{0}', space=sflag, size = 0x8, scoped, tag = 'scoped memory for tpu_custom_call.1']
    #allocation4 [shape = 's32[2]{0}', space=sflag, size = 0x8, scoped, tag = 'scoped memory for tpu_custom_call.1']
    #allocation5 [shape = 'u8[16384]{0}', space=vmem, size = 0x4000, scoped, tag = 'input window, operand 1']
    #allocation6 [shape = 's32[2]{0}', space=sflag, size = 0x8, scoped, tag = 'scoped memory for tpu_custom_call.1']
    #allocation7 [shape = 'u8[8192]{0}', space=vmem, size = 0x2000, scoped, tag = 'output window, operand 0']
    %7 = vsyncpa [#allocation3], 0
    %s8 = scalar_lea.sflag [#allocation3], 1
    %9 = vsyncpa %s8, 0
    %10 = vsyncpa [#allocation6], 0
    %s11 = scalar_lea.sflag [#allocation6], 1
    %12 = vsyncpa %s11, 0
    %13 = vsyncpa [#allocation4], 0
    %s14 = scalar_lea.sflag [#allocation4], 1
    %15 = vsyncpa %s14, 0
    loop: start=0, step=1, limit=6
    $region2: #{tpu_custom_call.1} parent=1 // loop_pre_header
      _
    $region3: #{tpu_custom_call.1} parent=1 // loop_header
      %s17 = sphi 0, %s21
      %p18 = scmp.ge.s32.totalorder %s17, 6
      %s24 = sphi 0, %s36
      %s25 = sphi 0, %s32
      %s26 = sphi 0, %s24
      %s27 = sphi 0, %s25
      %s28 = sphi 0, %s26
      %s29 = sphi 0, %s27
      %s41 = sphi 0, %s43
      %s44 = sphi 0, %s41
      %s45 = sphi 0, %s44
      %s61 = sphi 0, %s45
      %s69 = sphi 0, %s71
      %s72 = sphi 0, %s69
      %s73 = sphi 0, %s72
      %s89 = sphi 0, %s73
      %s97 = sphi 0, %s99
      %s100 = sphi 0, %s97
      %s101 = sphi 0, %s100
      %s117 = sphi 0, %s101
    $region4: #{tpu_custom_call.1} parent=1 // loop_header_branch
      %20 = sbr.rel (%p18) target = $region8
    $region5: #{tpu_custom_call.1} parent=1 // loop_body
      %s22 = ssub.s32 %s17, 1
      %s23 = ssub.s32 %s17, 2
      %s30 = sadd.s32 1, %s25
      %p31 = scmp.ge.s32.totalorder %s30, 2
      %s32 = scalar_select %p31, 0, %s30
      %s33 = sadd.s32 1, %s24
      %s34 = scalar_select %p31, %s33, %s24
      %p35 = scmp.ge.s32.totalorder %s34, 2
      %s36 = scalar_select %p35, 0, %s34
      %s37 = ssub.s32 %s24, %s36
      %s38 = ssub.s32 %s25, %s32
      %s39 = sor.u32 %s37, %s38
      %p40 = scmp.eq.s32.totalorder %s39, 0
      %s42 = sadd.s32 %s41, 1
      %s43 = scalar_select %p40, %s41, %s42
      %p46 = pneg %p40
      %p47 = scmp.eq.s32.totalorder %s17, 3
      %p48 = por %p46, %p47
      %p49 = scmp.ne.s32.totalorder %s41, %s44
      %p50 = scmp.eq.s32.totalorder %s17, 0
      %p51 = por %p49, %p50
      %p52 = scmp.ne.s32.totalorder %s41, %s44
      %p53 = scmp.eq.s32.totalorder %s22, 3
      %p54 = por %p52, %p53
      %p55 = scmp.ne.s32.totalorder %s44, %s45
      %p56 = scmp.eq.s32.totalorder %s22, 0
      %p57 = por %p55, %p56
      %p58 = scmp.ne.s32.totalorder %s44, %s45
      %p59 = scmp.eq.s32.totalorder %s23, 3
      %p60 = por %p58, %p59
      %p62 = scmp.ne.s32.totalorder %s45, %s61
      %p63 = scmp.eq.s32.totalorder %s23, 0
      %p64 = por %p62, %p63
      %s65 = ssub.s32 %s24, %s36
      %s66 = ssub.s32 %s25, %s32
      %s67 = sor.u32 %s65, %s66
      %p68 = scmp.eq.s32.totalorder %s67, 0
      %s70 = sadd.s32 %s69, 1
      %s71 = scalar_select %p68, %s69, %s70
      %p74 = pneg %p68
      %p75 = scmp.eq.s32.totalorder %s17, 3
      %p76 = por %p74, %p75
      %p77 = scmp.ne.s32.totalorder %s69, %s72
      %p78 = scmp.eq.s32.totalorder %s17, 0
      %p79 = por %p77, %p78
      %p80 = scmp.ne.s32.totalorder %s69, %s72
      %p81 = scmp.eq.s32.totalorder %s22, 3
      %p82 = por %p80, %p81
      %p83 = scmp.ne.s32.totalorder %s72, %s73
      %p84 = scmp.eq.s32.totalorder %s22, 0
      %p85 = por %p83, %p84
      %p86 = scmp.ne.s32.totalorder %s72, %s73
      %p87 = scmp.eq.s32.totalorder %s23, 3
      %p88 = por %p86, %p87
      %p90 = scmp.ne.s32.totalorder %s73, %s89
      %p91 = scmp.eq.s32.totalorder %s23, 0
      %p92 = por %p90, %p91
      %s93 = ssub.s32 %s24, %s36
      %s94 = ssub.s32 %s25, %s32
      %s95 = sor.u32 %s93, %s94
      %p96 = scmp.eq.s32.totalorder %s95, 0
      %s98 = sadd.s32 %s97, 1
      %s99 = scalar_select %p96, %s97, %s98
      %p102 = pneg %p96
      %p103 = scmp.eq.s32.totalorder %s17, 3
      %p104 = por %p102, %p103
      %p105 = scmp.ne.s32.totalorder %s97, %s100
      %p106 = scmp.eq.s32.totalorder %s17, 0
      %p107 = por %p105, %p106
      %p108 = scmp.ne.s32.totalorder %s97, %s100
      %p109 = scmp.eq.s32.totalorder %s22, 3
      %p110 = por %p108, %p109
      %p111 = scmp.ne.s32.totalorder %s100, %s101
      %p112 = scmp.eq.s32.totalorder %s22, 0
      %p113 = por %p111, %p112
      %p114 = scmp.ne.s32.totalorder %s100, %s101
      %p115 = scmp.eq.s32.totalorder %s23, 3
      %p116 = por %p114, %p115
      %p118 = scmp.ne.s32.totalorder %s101, %s117
      %p119 = scmp.eq.s32.totalorder %s23, 0
      %p120 = por %p118, %p119
      %p121 = scmp.le.s32.totalorder 1, %s17
      %p122 = scmp.lt.s32.totalorder %s17, 5
      %p123 = pnand %p121, %p122
      %p124 = pneg %p123
      // Predicated region
      $region9: #{tpu_custom_call.1} parent=5 // pred_check
        _
      $region10: #{tpu_custom_call.1} parent=5 // pred_check_branch
        %126 = sbr.rel (%p123) target = $region12
      $region11: #{tpu_custom_call.1} parent=5 // pred_region
        %s127 = ssub.s32 %s17, 1
      $region12: #{tpu_custom_call.1} parent=5 // pred_fallthru
        _
      %p128 = scmp.lt.s32.totalorder %s17, 4
      // Predicated region
      $region13: #{tpu_custom_call.1} parent=5 // pred_check
        %p129 = pneg %p128
      $region14: #{tpu_custom_call.1} parent=5 // pred_check_branch
        %131 = sbr.rel (%p129) target = $region16
      $region15: #{tpu_custom_call.1} parent=5 // pred_region
        // Predicated region
        $region17: #{tpu_custom_call.1} parent=15 // pred_check
          %p132 = pneg %p51
        $region18: #{tpu_custom_call.1} parent=15 // pred_check_branch
          %134 = sbr.rel (%p132) target = $region20
        $region19: #{tpu_custom_call.1} parent=15 // pred_region
          %s135 = sand.u32 %s41, 1
          %s136 = scalar_lea.sflag [#allocation3], %s135
          %s137 = sand.u32 %s41, 1
          %s138 = smul.addr %s137, 16
          %s139 = scalar_lea.vmem [#allocation2], %s138
          %141 = vsyncadd %s136, 0
          %s142 = smul.addr %s25, 2
          %s143 = smul.addr %s24, 4
          %s144 = sadd.s32 %s142, %s143
          %s145 = smul.addr %s144, 8
          %s146 = scalar_lea.hbm %s0, %s145
          %s147 = sshll.u32 %s146, 4
          %s148 = int_to_ptr.hbm [resolvable:$true] %s147
          %s149 = sshll.u32 %s139, 4
          %s150 = int_to_ptr.vmem [resolvable:$true] %s149
          %155 = dma.hbm_to_vmem [thread:$0]  %s148, 256, %s150, %s136, 128, 128, 8
        $region20: #{tpu_custom_call.1} parent=15 // pred_fallthru
          _
        // Predicated region
        $region21: #{tpu_custom_call.1} parent=15 // pred_check
          %p156 = pneg %p79
        $region22: #{tpu_custom_call.1} parent=15 // pred_check_branch
          %158 = sbr.rel (%p156) target = $region24
        $region23: #{tpu_custom_call.1} parent=15 // pred_region
          %s159 = sand.u32 %s69, 1
          %s160 = scalar_lea.sflag [#allocation6], %s159
          %s161 = sand.u32 %s69, 1
          %s162 = smul.addr %s161, 16
          %s163 = scalar_lea.vmem [#allocation5], %s162
          %165 = vsyncadd %s160, 0
          %s166 = smul.addr %s25, 2
          %s167 = smul.addr %s24, 4
          %s168 = sadd.s32 %s166, %s167
          %s169 = smul.addr %s168, 8
          %s170 = scalar_lea.hbm %s1, %s169
          %s171 = sshll.u32 %s170, 4
          %s172 = int_to_ptr.hbm [resolvable:$true] %s171
          %s173 = sshll.u32 %s163, 4
          %s174 = int_to_ptr.vmem [resolvable:$true] %s173
          %179 = dma.hbm_to_vmem [thread:$0]  %s172, 256, %s174, %s160, 128, 128, 8
        $region24: #{tpu_custom_call.1} parent=15 // pred_fallthru
          _
      $region16: #{tpu_custom_call.1} parent=5 // pred_fallthru
        _
      %p180 = scmp.le.s32.totalorder 1, %s17
      %p181 = scmp.lt.s32.totalorder %s17, 5
      %p182 = pnand %p180, %p181
      %p183 = pneg %p182
      // Predicated region
      $region25: #{tpu_custom_call.1} parent=5 // pred_check
        _
      $region26: #{tpu_custom_call.1} parent=5 // pred_check_branch
        %185 = sbr.rel (%p182) target = $region28
      $region27: #{tpu_custom_call.1} parent=5 // pred_region
        %s186 = ssub.s32 %s17, 1
        %s187 = sand.u32 %s44, 1
        %s188 = scalar_lea.sflag [#allocation3], %s187
        %s189 = sand.u32 %s44, 1
        %s190 = smul.addr %s189, 16
        %s191 = scalar_lea.vmem [#allocation2], %s190
        // Predicated region
        $region29: #{tpu_custom_call.1} parent=27 // pred_check
          %p192 = pneg %p57
        $region30: #{tpu_custom_call.1} parent=27 // pred_check_branch
          %194 = sbr.rel (%p192) target = $region32
        $region31: #{tpu_custom_call.1} parent=27 // pred_region
          %196 = dma.done %s188, 256
        $region32: #{tpu_custom_call.1} parent=27 // pred_fallthru
          _
        %s197 = sand.u32 %s72, 1
        %s198 = scalar_lea.sflag [#allocation6], %s197
        %s199 = sand.u32 %s72, 1
        %s200 = smul.addr %s199, 16
        %s201 = scalar_lea.vmem [#allocation5], %s200
        // Predicated region
        $region33: #{tpu_custom_call.1} parent=27 // pred_check
          %p202 = pneg %p85
        $region34: #{tpu_custom_call.1} parent=27 // pred_check_branch
          %204 = sbr.rel (%p202) target = $region36
        $region35: #{tpu_custom_call.1} parent=27 // pred_region
          %206 = dma.done %s198, 256
        $region36: #{tpu_custom_call.1} parent=27 // pred_fallthru
          _
        %s207 = sand.u32 %s44, 1
        %s208 = scalar_lea.sflag [#allocation3], %s207
        %s209 = sand.u32 %s44, 1
        %s210 = smul.addr %s209, 16
        %s211 = scalar_lea.vmem [#allocation2], %s210
        %p212 = pneg %p57
        %p213 = pneg %p54
        %s214 = sand.u32 %s72, 1
        %s215 = scalar_lea.sflag [#allocation6], %s214
        %s216 = sand.u32 %s72, 1
        %s217 = smul.addr %s216, 16
        %s218 = scalar_lea.vmem [#allocation5], %s217
        %p219 = pneg %p85
        %p220 = pneg %p82
        %p221 = pneg %p113
        %p222 = pneg %p110
        %s223 = sand.u32 %s100, 1
        %s224 = scalar_lea.sflag [#allocation4], %s223
        %s225 = sand.u32 %s100, 1
        %s226 = smul.addr %s225, 8
        %s227 = scalar_lea.vmem [#allocation7], %s226
        %v228 = vld [vmem:[%s191] sm:$0xff]
        %v229 = vld [vmem:[%s191 + $0x8] sm:$0xff]
        %v230 = vld [vmem:[%s201] sm:$0xff]
        %v231 = vld [vmem:[%s201 + $0x8] sm:$0xff]
        %v232 = vand.u32 2147483647, %v228
        %v233 = vand.u32 2147483647, %v229
        %v234 = vsub.f32 0.0, %v232
        %v235 = vsub.f32 0.0, %v233
        %v236 = vmul.f32 %v234, 1.442695
        %v237 = vpow.pop %v236
        %v238 = vmul.f32 %v235, 1.442695
        %v239 = vpow.pop %v238
        %v240 = vmax.f32 %v228, 0.0
        %v241 = vmax.f32 %v229, 0.0
        %v242 = vmul.f32 %v228, %v230
        %v243 = vmul.f32 %v229, %v231
        %v244 = vsub.f32 %v240, %v242
        %v245 = vsub.f32 %v241, %v243
        %v246 = vadd.f32 %v237, 1.0
        %v247 = vadd.f32 %v239, 1.0
        %v248 = vlog2.pop %v246
        %v249 = vmul.f32 %v248, 0.6931472
        %v250 = vlog2.pop %v247
        %v251 = vmul.f32 %v250, 0.6931472
        %v252 = vadd.f32 %v244, %v249
        %v253 = vadd.f32 %v245, %v251
        %v254 = vrcp.pop %v246
        %v255 = vmul.f32 %v246, %v254
        %v256 = vsub.f32 1.0, %v255
        %v257 = vmul.f32 %v254, %v256
        %v258 = vadd.f32 %v254, %v257
        %vm259 = vweird.f32 %v246
        %vm260 = vweird.f32 %v254
        %vm261 = vmor %vm259, %vm260
        %v262 = vsel %vm261, %v254, %v258
        %v263 = vand.u32 2147483647, %v246
        %vm264 = vcmp.eq.f32.partialorder %v263, 8.507059e+37
        %v265 = vand.u32 %v246, 2147483648
        %v266 = vor.u32 1.1754944e-38, %v265
        %v267 = vsel %vm264, %v266, %v262
        %v268 = vmul.f32 1.0, %v267
        %v269 = vrcp.pop %v247
        %v270 = vmul.f32 %v247, %v269
        %v271 = vsub.f32 1.0, %v270
        %v272 = vmul.f32 %v269, %v271
        %v273 = vadd.f32 %v269, %v272
        %vm274 = vweird.f32 %v247
        %vm275 = vweird.f32 %v269
        %vm276 = vmor %vm274, %vm275
        %v277 = vsel %vm276, %v269, %v273
        %v278 = vand.u32 2147483647, %v247
        %vm279 = vcmp.eq.f32.partialorder %v278, 8.507059e+37
        %v280 = vand.u32 %v247, 2147483648
        %v281 = vor.u32 1.1754944e-38, %v280
        %v282 = vsel %vm279, %v281, %v277
        %v283 = vmul.f32 1.0, %v282
        %vm284 = vcmp.ge.f32.partialorder %v228, 0.0
        %vm285 = vcmp.ge.f32.partialorder %v229, 0.0
        %v286 = vmul.f32 %v237, %v268
        %v287 = vmul.f32 %v239, %v283
        %v288 = vsel %vm284, %v268, %v286
        %v289 = vsel %vm285, %v283, %v287
        %v290 = vadd.f32 %v252, %v253
        %v291 = vrot.slane %v290, 4
        %v292 = vadd.f32 %v290, %v291
        %v293 = vrot.slane %v292, 2
        %v294 = vadd.f32 %v292, %v293
        %v295 = vrot.slane %v294, 1
        %v296 = vadd.f32 %v294, %v295
        %297 = vst [vmem:[%s227] sm:$0x1] %v296
        %v298 = vmul.f32 %v288, %v230
        %v299 = vmul.f32 %v289, %v231
        %v300 = vadd.f32 %v298, %v299
        %v301 = vrot.slane %v300, 4
        %v302 = vadd.f32 %v300, %v301
        %v303 = vrot.slane %v302, 2
        %v304 = vadd.f32 %v302, %v303
        %v305 = vrot.slane %v304, 1
        %v306 = vadd.f32 %v304, %v305
        %307 = vst [vmem:[%s227 + $0x1] sm:$0x1] %v306
        %v308 = vadd.f32 %v288, %v289
        %v309 = vrot.slane %v308, 4
        %v310 = vadd.f32 %v308, %v309
        %v311 = vrot.slane %v310, 2
        %v312 = vadd.f32 %v310, %v311
        %v313 = vrot.slane %v312, 1
        %v314 = vadd.f32 %v312, %v313
        %315 = vst [vmem:[%s227 + $0x2] sm:$0x1] %v314
        %v316 = vadd.f32 %v230, %v231
        %v317 = vrot.slane %v316, 4
        %v318 = vadd.f32 %v316, %v317
        %v319 = vrot.slane %v318, 2
        %v320 = vadd.f32 %v318, %v319
        %v321 = vrot.slane %v320, 1
        %v322 = vadd.f32 %v320, %v321
        %323 = vst [vmem:[%s227 + $0x3] sm:$0x1] %v322
        %p324 = scmp.eq.s32.totalorder %s27, 0
        // Predicated region
        $region37: #{tpu_custom_call.1} parent=27 // pred_check
          %p325 = pneg %p324
        $region38: #{tpu_custom_call.1} parent=27 // pred_check_branch
          %327 = sbr.rel (%p325) target = $region40
        $region39: #{tpu_custom_call.1} parent=27 // pred_region
          %328 = vst [vmem:[%s227 + $0x4] sm:$0xf] 0.0
        $region40: #{tpu_custom_call.1} parent=27 // pred_fallthru
          _
        %p329 = scmp.ge.s32.totalorder %s27, 1
        // Predicated region
        $region41: #{tpu_custom_call.1} parent=27 // pred_check
          %p330 = pneg %p329
        $region42: #{tpu_custom_call.1} parent=27 // pred_check_branch
          %332 = sbr.rel (%p330) target = $region44
        $region43: #{tpu_custom_call.1} parent=27 // pred_region
          %v333 = vlaneseq
          %v334 = vshrl.u32 %v333, 7
          %v335 = vadd.s32 %v334, 8
          %v336 = vlaneseq
          %v337 = vand.u32 %v336, 127
          %vm338 = vcmp.eq.s32.totalorder %v334, 0
          %vm339 = vcmp.eq.s32.totalorder %v335, 0
          %vm340 = vcmp.eq.s32.totalorder %v334, 15
          %vm341 = vcmp.eq.s32.totalorder %v335, 15
          %vm342 = vcmp.eq.s32.totalorder %v337, 0
          %vm343 = vcmp.eq.s32.totalorder %v337, 127
          %v344 = vrot.slane %v288, 1
          %v345 = vrot.slane %v289, 1
          %vm346 = vcmp.lt.s32.totalorder %v334, 7
          %v347 = vsel %vm346, %v344, %v345
          %v348 = vsel %vm346, %v345, %v344
          %v349 = vsel %vm340, 1, 0
          %v350 = vsel %vm341, 1, 0
          %vm351 = vcmp.eq.s32.totalorder %v349, 1
          %vm352 = vcmp.eq.s32.totalorder %v350, 1
          %v353 = vsel %vm351, 1e+30, %v347
          %v354 = vsel %vm352, 1e+30, %v348
          %v355 = vrot.slane %v288, 7
          %v356 = vrot.slane %v289, 7
          %vm357 = vcmp.lt.s32.totalorder %v334, 1
          %v358 = vsel %vm357, %v355, %v356
          %v359 = vsel %vm357, %v356, %v355
          %v360 = vsel %vm338, 1, 0
          %v361 = vsel %vm339, 1, 0
          %vm362 = vcmp.eq.s32.totalorder %v360, 1
          %vm363 = vcmp.eq.s32.totalorder %v361, 1
          %v364 = vsel %vm362, 1e+30, %v359
          %v365 = vsel %vm363, 1e+30, %v358
          %v366 = vmin.f32 %v353, %v288
          %v367 = vmin.f32 %v354, %v289
          %v368 = vmin.f32 %v366, %v364
          %v369 = vmin.f32 %v367, %v365
          %370 = vrot.lane.b32.xlu0 %v288, 127
          %v371 = vpop.permute.xlu0 %370
          %372 = vrot.lane.b32.xlu0 %v289, 127
          %v373 = vpop.permute.xlu0 %372
          %v374 = vsel %vm343, 1, 0
          %vm375 = vcmp.eq.s32.totalorder %v374, 1
          %v376 = vsel %vm375, 1e+30, %v371
          %v377 = vsel %vm375, 1e+30, %v373
          %378 = vrot.lane.b32.xlu0 %v288, 1
          %v379 = vpop.permute.xlu0 %378
          %380 = vrot.lane.b32.xlu0 %v289, 1
          %v381 = vpop.permute.xlu0 %380
          %v382 = vsel %vm342, 1, 0
          %vm383 = vcmp.eq.s32.totalorder %v382, 1
          %v384 = vsel %vm383, 1e+30, %v379
          %v385 = vsel %vm383, 1e+30, %v381
          %v386 = vmin.f32 %v376, %v288
          %v387 = vmin.f32 %v377, %v289
          %v388 = vmin.f32 %v386, %v384
          %v389 = vmin.f32 %v387, %v385
          %v390 = vmin.f32 %v368, %v388
          %v391 = vmin.f32 %v369, %v389
          %392 = vrot.lane.b32.xlu0 %v390, 127
          %v393 = vpop.permute.xlu0 %392
          %394 = vrot.lane.b32.xlu0 %v391, 127
          %v395 = vpop.permute.xlu0 %394
          %v396 = vsel %vm375, -1e+30, %v393
          %v397 = vsel %vm375, -1e+30, %v395
          %398 = vrot.lane.b32.xlu0 %v390, 1
          %v399 = vpop.permute.xlu0 %398
          %400 = vrot.lane.b32.xlu0 %v391, 1
          %v401 = vpop.permute.xlu0 %400
          %v402 = vsel %vm383, -1e+30, %v399
          %v403 = vsel %vm383, -1e+30, %v401
          %v404 = vmax.f32 %v396, %v390
          %v405 = vmax.f32 %v397, %v391
          %v406 = vmax.f32 %v404, %v402
          %v407 = vmax.f32 %v405, %v403
          %v408 = vrot.slane %v406, 1
          %v409 = vrot.slane %v407, 1
          %v410 = vsel %vm346, %v408, %v409
          %v411 = vsel %vm346, %v409, %v408
          %v412 = vsel %vm351, -1e+30, %v410
          %v413 = vsel %vm352, -1e+30, %v411
          %v414 = vrot.slane %v406, 7
          %v415 = vrot.slane %v407, 7
          %v416 = vsel %vm357, %v414, %v415
          %v417 = vsel %vm357, %v415, %v414
          %v418 = vsel %vm362, -1e+30, %v417
          %v419 = vsel %vm363, -1e+30, %v416
          %v420 = vmax.f32 %v412, %v406
          %v421 = vmax.f32 %v413, %v407
          %v422 = vmax.f32 %v420, %v418
          %v423 = vmax.f32 %v421, %v419
          %v424 = vsub.f32 %v288, %v422
          %v425 = vsub.f32 %v289, %v423
          %v426 = vmax.f32 %v424, 0.0
          %v427 = vmax.f32 %v425, 0.0
          %v428 = vrot.slane %v390, 1
          %v429 = vrot.slane %v391, 1
          %v430 = vsel %vm346, %v428, %v429
          %v431 = vsel %vm346, %v429, %v428
          %v432 = vsel %vm351, 1e+30, %v430
          %v433 = vsel %vm352, 1e+30, %v431
          %v434 = vrot.slane %v390, 7
          %v435 = vrot.slane %v391, 7
          %v436 = vsel %vm357, %v434, %v435
          %v437 = vsel %vm357, %v435, %v434
          %v438 = vsel %vm362, 1e+30, %v437
          %v439 = vsel %vm363, 1e+30, %v436
          %v440 = vmin.f32 %v432, %v390
          %v441 = vmin.f32 %v433, %v391
          %v442 = vmin.f32 %v440, %v438
          %v443 = vmin.f32 %v441, %v439
          %v444 = vsel %vm375, 1e+30, %v393
          %v445 = vsel %vm375, 1e+30, %v395
          %v446 = vsel %vm383, 1e+30, %v399
          %v447 = vsel %vm383, 1e+30, %v401
          %v448 = vmin.f32 %v444, %v390
          %v449 = vmin.f32 %v445, %v391
          %v450 = vmin.f32 %v448, %v446
          %v451 = vmin.f32 %v449, %v447
          %v452 = vmin.f32 %v442, %v450
          %v453 = vmin.f32 %v443, %v451
          %454 = vrot.lane.b32.xlu0 %v452, 127
          %v455 = vpop.permute.xlu0 %454
          %456 = vrot.lane.b32.xlu0 %v453, 127
          %v457 = vpop.permute.xlu0 %456
          %v458 = vsel %vm375, -1e+30, %v455
          %v459 = vsel %vm375, -1e+30, %v457
          %460 = vrot.lane.b32.xlu0 %v452, 1
          %v461 = vpop.permute.xlu0 %460
          %462 = vrot.lane.b32.xlu0 %v453, 1
          %v463 = vpop.permute.xlu0 %462
          %v464 = vsel %vm383, -1e+30, %v461
          %v465 = vsel %vm383, -1e+30, %v463
          %v466 = vmax.f32 %v458, %v452
          %v467 = vmax.f32 %v459, %v453
          %v468 = vmax.f32 %v466, %v464
          %v469 = vmax.f32 %v467, %v465
          %v470 = vrot.slane %v468, 1
          %v471 = vrot.slane %v469, 1
          %v472 = vsel %vm346, %v470, %v471
          %v473 = vsel %vm346, %v471, %v470
          %v474 = vsel %vm351, -1e+30, %v472
          %v475 = vsel %vm352, -1e+30, %v473
          %v476 = vrot.slane %v468, 7
          %v477 = vrot.slane %v469, 7
          %v478 = vsel %vm357, %v476, %v477
          %v479 = vsel %vm357, %v477, %v476
          %v480 = vsel %vm362, -1e+30, %v479
          %v481 = vsel %vm363, -1e+30, %v478
          %v482 = vmax.f32 %v474, %v468
          %v483 = vmax.f32 %v475, %v469
          %v484 = vmax.f32 %v482, %v480
          %v485 = vmax.f32 %v483, %v481
          %v486 = vsub.f32 %v390, %v484
          %v487 = vsub.f32 %v391, %v485
          %v488 = vmax.f32 %v486, 0.0
          %v489 = vmax.f32 %v487, 0.0
          %v490 = vmul.f32 %v426, %v488
          %v491 = vmul.f32 %v427, %v489
          %v492 = vsub.f32 %v488, %v490
          %v493 = vsub.f32 %v489, %v491
          %v494 = vmax.f32 %v492, 0.0
          %v495 = vmax.f32 %v493, 0.0
          %v496 = vadd.f32 %v426, %v494
          %v497 = vadd.f32 %v427, %v495
          %v498 = vrot.slane %v452, 1
          %v499 = vrot.slane %v453, 1
          %v500 = vsel %vm346, %v498, %v499
          %v501 = vsel %vm346, %v499, %v498
          %v502 = vsel %vm351, 1e+30, %v500
          %v503 = vsel %vm352, 1e+30, %v501
          %v504 = vrot.slane %v452, 7
          %v505 = vrot.slane %v453, 7
          %v506 = vsel %vm357, %v504, %v505
          %v507 = vsel %vm357, %v505, %v504
          %v508 = vsel %vm362, 1e+30, %v507
          %v509 = vsel %vm363, 1e+30, %v506
          %v510 = vmin.f32 %v502, %v452
          %v511 = vmin.f32 %v503, %v453
          %v512 = vmin.f32 %v510, %v508
          %v513 = vmin.f32 %v511, %v509
          %v514 = vsel %vm375, 1e+30, %v455
          %v515 = vsel %vm375, 1e+30, %v457
          %v516 = vsel %vm383, 1e+30, %v461
          %v517 = vsel %vm383, 1e+30, %v463
          %v518 = vmin.f32 %v514, %v452
          %v519 = vmin.f32 %v515, %v453
          %v520 = vmin.f32 %v518, %v516
          %v521 = vmin.f32 %v519, %v517
          %v522 = vmin.f32 %v512, %v520
          %v523 = vmin.f32 %v513, %v521
          %524 = vrot.lane.b32.xlu0 %v522, 127
          %v525 = vpop.permute.xlu0 %524
          %526 = vrot.lane.b32.xlu0 %v523, 127
          %v527 = vpop.permute.xlu0 %526
          %v528 = vsel %vm375, -1e+30, %v525
          %v529 = vsel %vm375, -1e+30, %v527
          %530 = vrot.lane.b32.xlu0 %v522, 1
          %v531 = vpop.permute.xlu0 %530
          %532 = vrot.lane.b32.xlu0 %v523, 1
          %v533 = vpop.permute.xlu0 %532
          %v534 = vsel %vm383, -1e+30, %v531
          %v535 = vsel %vm383, -1e+30, %v533
          %v536 = vmax.f32 %v528, %v522
          %v537 = vmax.f32 %v529, %v523
          %v538 = vmax.f32 %v536, %v534
          %v539 = vmax.f32 %v537, %v535
          %v540 = vrot.slane %v538, 1
          %v541 = vrot.slane %v539, 1
          %v542 = vsel %vm346, %v540, %v541
          %v543 = vsel %vm346, %v541, %v540
          %v544 = vsel %vm351, -1e+30, %v542
          %v545 = vsel %vm352, -1e+30, %v543
          %v546 = vrot.slane %v538, 7
          %v547 = vrot.slane %v539, 7
          %v548 = vsel %vm357, %v546, %v547
          %v549 = vsel %vm357, %v547, %v546
          %v550 = vsel %vm362, -1e+30, %v549
          %v551 = vsel %vm363, -1e+30, %v548
          %v552 = vmax.f32 %v544, %v538
          %v553 = vmax.f32 %v545, %v539
          %v554 = vmax.f32 %v552, %v550
          %v555 = vmax.f32 %v553, %v551
          %v556 = vsub.f32 %v452, %v554
          %v557 = vsub.f32 %v453, %v555
          %v558 = vmax.f32 %v556, 0.0
          %v559 = vmax.f32 %v557, 0.0
          %v560 = vmul.f32 %v496, %v558
          %v561 = vmul.f32 %v497, %v559
          %v562 = vsub.f32 %v558, %v560
          %v563 = vsub.f32 %v559, %v561
          %v564 = vmax.f32 %v562, 0.0
          %v565 = vmax.f32 %v563, 0.0
          %v566 = vadd.f32 %v496, %v564
          %v567 = vadd.f32 %v497, %v565
          %v568 = vrot.slane %v522, 1
          %v569 = vrot.slane %v523, 1
          %v570 = vsel %vm346, %v568, %v569
          %v571 = vsel %vm346, %v569, %v568
          %v572 = vsel %vm351, 1e+30, %v570
          %v573 = vsel %vm352, 1e+30, %v571
          %v574 = vrot.slane %v522, 7
          %v575 = vrot.slane %v523, 7
          %v576 = vsel %vm357, %v574, %v575
          %v577 = vsel %vm357, %v575, %v574
          %v578 = vsel %vm362, 1e+30, %v577
          %v579 = vsel %vm363, 1e+30, %v576
          %v580 = vmin.f32 %v572, %v522
          %v581 = vmin.f32 %v573, %v523
          %v582 = vmin.f32 %v580, %v578
          %v583 = vmin.f32 %v581, %v579
          %v584 = vsel %vm375, 1e+30, %v525
          %v585 = vsel %vm375, 1e+30, %v527
          %v586 = vsel %vm383, 1e+30, %v531
          %v587 = vsel %vm383, 1e+30, %v533
          %v588 = vmin.f32 %v584, %v522
          %v589 = vmin.f32 %v585, %v523
          %v590 = vmin.f32 %v588, %v586
          %v591 = vmin.f32 %v589, %v587
          %v592 = vmin.f32 %v582, %v590
          %v593 = vmin.f32 %v583, %v591
          %594 = vrot.lane.b32.xlu0 %v592, 127
          %v595 = vpop.permute.xlu0 %594
          %596 = vrot.lane.b32.xlu0 %v593, 127
          %v597 = vpop.permute.xlu0 %596
          %v598 = vsel %vm375, -1e+30, %v595
          %v599 = vsel %vm375, -1e+30, %v597
          %600 = vrot.lane.b32.xlu0 %v592, 1
          %v601 = vpop.permute.xlu0 %600
          %602 = vrot.lane.b32.xlu0 %v593, 1
          %v603 = vpop.permute.xlu0 %602
          %v604 = vsel %vm383, -1e+30, %v601
          %v605 = vsel %vm383, -1e+30, %v603
          %v606 = vmax.f32 %v598, %v592
          %v607 = vmax.f32 %v599, %v593
          %v608 = vmax.f32 %v606, %v604
          %v609 = vmax.f32 %v607, %v605
          %v610 = vrot.slane %v608, 1
          %v611 = vrot.slane %v609, 1
          %v612 = vsel %vm346, %v610, %v611
          %v613 = vsel %vm346, %v611, %v610
          %v614 = vsel %vm351, -1e+30, %v612
          %v615 = vsel %vm352, -1e+30, %v613
          %v616 = vrot.slane %v608, 7
          %v617 = vrot.slane %v609, 7
          %v618 = vsel %vm357, %v616, %v617
          %v619 = vsel %vm357, %v617, %v616
          %v620 = vsel %vm362, -1e+30, %v619
          %v621 = vsel %vm363, -1e+30, %v618
          %v622 = vmax.f32 %v614, %v608
          %v623 = vmax.f32 %v615, %v609
          %v624 = vmax.f32 %v622, %v620
          %v625 = vmax.f32 %v623, %v621
          %v626 = vsub.f32 %v522, %v624
          %v627 = vsub.f32 %v523, %v625
          %v628 = vmax.f32 %v626, 0.0
          %v629 = vmax.f32 %v627, 0.0
          %v630 = vmul.f32 %v566, %v628
          %v631 = vmul.f32 %v567, %v629
          %v632 = vsub.f32 %v628, %v630
          %v633 = vsub.f32 %v629, %v631
          %v634 = vmax.f32 %v632, 0.0
          %v635 = vmax.f32 %v633, 0.0
          %v636 = vadd.f32 %v566, %v634
          %v637 = vadd.f32 %v567, %v635
          %v638 = vmul.f32 %v636, %v230
          %v639 = vmul.f32 %v637, %v231
          %v640 = vadd.f32 %v638, %v639
          %v641 = vrot.slane %v640, 4
          %v642 = vadd.f32 %v640, %v641
          %v643 = vrot.slane %v642, 2
          %v644 = vadd.f32 %v642, %v643
          %v645 = vrot.slane %v644, 1
          %v646 = vadd.f32 %v644, %v645
          %647 = vst [vmem:[%s227 + $0x4] sm:$0x1] %v646
          %v648 = vadd.f32 %v636, %v637
          %v649 = vrot.slane %v648, 4
          %v650 = vadd.f32 %v648, %v649
          %v651 = vrot.slane %v650, 2
          %v652 = vadd.f32 %v650, %v651
          %v653 = vrot.slane %v652, 1
          %v654 = vadd.f32 %v652, %v653
          %655 = vst [vmem:[%s227 + $0x5] sm:$0x1] %v654
          %v656 = vrot.slane %v230, 1
          %v657 = vrot.slane %v231, 1
          %v658 = vsel %vm346, %v656, %v657
          %v659 = vsel %vm346, %v657, %v656
          %v660 = vsel %vm351, 1e+30, %v658
          %v661 = vsel %vm352, 1e+30, %v659
          %v662 = vrot.slane %v230, 7
          %v663 = vrot.slane %v231, 7
          %v664 = vsel %vm357, %v662, %v663
          %v665 = vsel %vm357, %v663, %v662
          %v666 = vsel %vm362, 1e+30, %v665
          %v667 = vsel %vm363, 1e+30, %v664
          %v668 = vmin.f32 %v660, %v230
          %v669 = vmin.f32 %v661, %v231
          %v670 = vmin.f32 %v668, %v666
          %v671 = vmin.f32 %v669, %v667
          %672 = vrot.lane.b32.xlu0 %v230, 127
          %v673 = vpop.permute.xlu0 %672
          %674 = vrot.lane.b32.xlu0 %v231, 127
          %v675 = vpop.permute.xlu0 %674
          %v676 = vsel %vm375, 1e+30, %v673
          %v677 = vsel %vm375, 1e+30, %v675
          %678 = vrot.lane.b32.xlu0 %v230, 1
          %v679 = vpop.permute.xlu0 %678
          %680 = vrot.lane.b32.xlu0 %v231, 1
          %v681 = vpop.permute.xlu0 %680
          %v682 = vsel %vm383, 1e+30, %v679
          %v683 = vsel %vm383, 1e+30, %v681
          %v684 = vmin.f32 %v676, %v230
          %v685 = vmin.f32 %v677, %v231
          %v686 = vmin.f32 %v684, %v682
          %v687 = vmin.f32 %v685, %v683
          %v688 = vmin.f32 %v670, %v686
          %v689 = vmin.f32 %v671, %v687
          %690 = vrot.lane.b32.xlu0 %v688, 127
          %v691 = vpop.permute.xlu0 %690
          %692 = vrot.lane.b32.xlu0 %v689, 127
          %v693 = vpop.permute.xlu0 %692
          %v694 = vsel %vm375, -1e+30, %v691
          %v695 = vsel %vm375, -1e+30, %v693
          %696 = vrot.lane.b32.xlu0 %v688, 1
          %v697 = vpop.permute.xlu0 %696
          %698 = vrot.lane.b32.xlu0 %v689, 1
          %v699 = vpop.permute.xlu0 %698
          %v700 = vsel %vm383, -1e+30, %v697
          %v701 = vsel %vm383, -1e+30, %v699
          %v702 = vmax.f32 %v694, %v688
          %v703 = vmax.f32 %v695, %v689
          %v704 = vmax.f32 %v702, %v700
          %v705 = vmax.f32 %v703, %v701
          %v706 = vrot.slane %v704, 1
          %v707 = vrot.slane %v705, 1
          %v708 = vsel %vm346, %v706, %v707
          %v709 = vsel %vm346, %v707, %v706
          %v710 = vsel %vm351, -1e+30, %v708
          %v711 = vsel %vm352, -1e+30, %v709
          %v712 = vrot.slane %v704, 7
          %v713 = vrot.slane %v705, 7
          %v714 = vsel %vm357, %v712, %v713
          %v715 = vsel %vm357, %v713, %v712
          %v716 = vsel %vm362, -1e+30, %v715
          %v717 = vsel %vm363, -1e+30, %v714
          %v718 = vmax.f32 %v710, %v704
          %v719 = vmax.f32 %v711, %v705
          %v720 = vmax.f32 %v718, %v716
          %v721 = vmax.f32 %v719, %v717
          %v722 = vsub.f32 %v230, %v720
          %v723 = vsub.f32 %v231, %v721
          %v724 = vmax.f32 %v722, 0.0
          %v725 = vmax.f32 %v723, 0.0
          %v726 = vrot.slane %v688, 1
          %v727 = vrot.slane %v689, 1
          %v728 = vsel %vm346, %v726, %v727
          %v729 = vsel %vm346, %v727, %v726
          %v730 = vsel %vm351, 1e+30, %v728
          %v731 = vsel %vm352, 1e+30, %v729
          %v732 = vrot.slane %v688, 7
          %v733 = vrot.slane %v689, 7
          %v734 = vsel %vm357, %v732, %v733
          %v735 = vsel %vm357, %v733, %v732
          %v736 = vsel %vm362, 1e+30, %v735
          %v737 = vsel %vm363, 1e+30, %v734
          %v738 = vmin.f32 %v730, %v688
          %v739 = vmin.f32 %v731, %v689
          %v740 = vmin.f32 %v738, %v736
          %v741 = vmin.f32 %v739, %v737
          %v742 = vsel %vm375, 1e+30, %v691
          %v743 = vsel %vm375, 1e+30, %v693
          %v744 = vsel %vm383, 1e+30, %v697
          %v745 = vsel %vm383, 1e+30, %v699
          %v746 = vmin.f32 %v742, %v688
          %v747 = vmin.f32 %v743, %v689
          %v748 = vmin.f32 %v746, %v744
          %v749 = vmin.f32 %v747, %v745
          %v750 = vmin.f32 %v740, %v748
          %v751 = vmin.f32 %v741, %v749
          %752 = vrot.lane.b32.xlu0 %v750, 127
          %v753 = vpop.permute.xlu0 %752
          %754 = vrot.lane.b32.xlu0 %v751, 127
          %v755 = vpop.permute.xlu0 %754
          %v756 = vsel %vm375, -1e+30, %v753
          %v757 = vsel %vm375, -1e+30, %v755
          %758 = vrot.lane.b32.xlu0 %v750, 1
          %v759 = vpop.permute.xlu0 %758
          %760 = vrot.lane.b32.xlu0 %v751, 1
          %v761 = vpop.permute.xlu0 %760
          %v762 = vsel %vm383, -1e+30, %v759
          %v763 = vsel %vm383, -1e+30, %v761
          %v764 = vmax.f32 %v756, %v750
          %v765 = vmax.f32 %v757, %v751
          %v766 = vmax.f32 %v764, %v762
          %v767 = vmax.f32 %v765, %v763
          %v768 = vrot.slane %v766, 1
          %v769 = vrot.slane %v767, 1
          %v770 = vsel %vm346, %v768, %v769
          %v771 = vsel %vm346, %v769, %v768
          %v772 = vsel %vm351, -1e+30, %v770
          %v773 = vsel %vm352, -1e+30, %v771
          %v774 = vrot.slane %v766, 7
          %v775 = vrot.slane %v767, 7
          %v776 = vsel %vm357, %v774, %v775
          %v777 = vsel %vm357, %v775, %v774
          %v778 = vsel %vm362, -1e+30, %v777
          %v779 = vsel %vm363, -1e+30, %v776
          %v780 = vmax.f32 %v772, %v766
          %v781 = vmax.f32 %v773, %v767
          %v782 = vmax.f32 %v780, %v778
          %v783 = vmax.f32 %v781, %v779
          %v784 = vsub.f32 %v688, %v782
          %v785 = vsub.f32 %v689, %v783
          %v786 = vmax.f32 %v784, 0.0
          %v787 = vmax.f32 %v785, 0.0
          %v788 = vmul.f32 %v724, %v786
          %v789 = vmul.f32 %v725, %v787
          %v790 = vsub.f32 %v786, %v788
          %v791 = vsub.f32 %v787, %v789
          %v792 = vmax.f32 %v790, 0.0
          %v793 = vmax.f32 %v791, 0.0
          %v794 = vadd.f32 %v724, %v792
          %v795 = vadd.f32 %v725, %v793
          %v796 = vrot.slane %v750, 1
          %v797 = vrot.slane %v751, 1
          %v798 = vsel %vm346, %v796, %v797
          %v799 = vsel %vm346, %v797, %v796
          %v800 = vsel %vm351, 1e+30, %v798
          %v801 = vsel %vm352, 1e+30, %v799
          %v802 = vrot.slane %v750, 7
          %v803 = vrot.slane %v751, 7
          %v804 = vsel %vm357, %v802, %v803
          %v805 = vsel %vm357, %v803, %v802
          %v806 = vsel %vm362, 1e+30, %v805
          %v807 = vsel %vm363, 1e+30, %v804
          %v808 = vmin.f32 %v800, %v750
          %v809 = vmin.f32 %v801, %v751
          %v810 = vmin.f32 %v808, %v806
          %v811 = vmin.f32 %v809, %v807
          %v812 = vsel %vm375, 1e+30, %v753
          %v813 = vsel %vm375, 1e+30, %v755
          %v814 = vsel %vm383, 1e+30, %v759
          %v815 = vsel %vm383, 1e+30, %v761
          %v816 = vmin.f32 %v812, %v750
          %v817 = vmin.f32 %v813, %v751
          %v818 = vmin.f32 %v816, %v814
          %v819 = vmin.f32 %v817, %v815
          %v820 = vmin.f32 %v810, %v818
          %v821 = vmin.f32 %v811, %v819
          %822 = vrot.lane.b32.xlu0 %v820, 127
          %v823 = vpop.permute.xlu0 %822
          %824 = vrot.lane.b32.xlu0 %v821, 127
          %v825 = vpop.permute.xlu0 %824
          %v826 = vsel %vm375, -1e+30, %v823
          %v827 = vsel %vm375, -1e+30, %v825
          %828 = vrot.lane.b32.xlu0 %v820, 1
          %v829 = vpop.permute.xlu0 %828
          %830 = vrot.lane.b32.xlu0 %v821, 1
          %v831 = vpop.permute.xlu0 %830
          %v832 = vsel %vm383, -1e+30, %v829
          %v833 = vsel %vm383, -1e+30, %v831
          %v834 = vmax.f32 %v826, %v820
          %v835 = vmax.f32 %v827, %v821
          %v836 = vmax.f32 %v834, %v832
          %v837 = vmax.f32 %v835, %v833
          %v838 = vrot.slane %v836, 1
          %v839 = vrot.slane %v837, 1
          %v840 = vsel %vm346, %v838, %v839
          %v841 = vsel %vm346, %v839, %v838
          %v842 = vsel %vm351, -1e+30, %v840
          %v843 = vsel %vm352, -1e+30, %v841
          %v844 = vrot.slane %v836, 7
          %v845 = vrot.slane %v837, 7
          %v846 = vsel %vm357, %v844, %v845
          %v847 = vsel %vm357, %v845, %v844
          %v848 = vsel %vm362, -1e+30, %v847
          %v849 = vsel %vm363, -1e+30, %v846
          %v850 = vmax.f32 %v842, %v836
          %v851 = vmax.f32 %v843, %v837
          %v852 = vmax.f32 %v850, %v848
          %v853 = vmax.f32 %v851, %v849
          %v854 = vsub.f32 %v750, %v852
          %v855 = vsub.f32 %v751, %v853
          %v856 = vmax.f32 %v854, 0.0
          %v857 = vmax.f32 %v855, 0.0
          %v858 = vmul.f32 %v794, %v856
          %v859 = vmul.f32 %v795, %v857
          %v860 = vsub.f32 %v856, %v858
          %v861 = vsub.f32 %v857, %v859
          %v862 = vmax.f32 %v860, 0.0
          %v863 = vmax.f32 %v861, 0.0
          %v864 = vadd.f32 %v794, %v862
          %v865 = vadd.f32 %v795, %v863
          %v866 = vrot.slane %v820, 1
          %v867 = vrot.slane %v821, 1
          %v868 = vsel %vm346, %v866, %v867
          %v869 = vsel %vm346, %v867, %v866
          %v870 = vsel %vm351, 1e+30, %v868
          %v871 = vsel %vm352, 1e+30, %v869
          %v872 = vrot.slane %v820, 7
          %v873 = vrot.slane %v821, 7
          %v874 = vsel %vm357, %v872, %v873
          %v875 = vsel %vm357, %v873, %v872
          %v876 = vsel %vm362, 1e+30, %v875
          %v877 = vsel %vm363, 1e+30, %v874
          %v878 = vmin.f32 %v870, %v820
          %v879 = vmin.f32 %v871, %v821
          %v880 = vmin.f32 %v878, %v876
          %v881 = vmin.f32 %v879, %v877
          %v882 = vsel %vm375, 1e+30, %v823
          %v883 = vsel %vm375, 1e+30, %v825
          %v884 = vsel %vm383, 1e+30, %v829
          %v885 = vsel %vm383, 1e+30, %v831
          %v886 = vmin.f32 %v882, %v820
          %v887 = vmin.f32 %v883, %v821
          %v888 = vmin.f32 %v886, %v884
          %v889 = vmin.f32 %v887, %v885
          %v890 = vmin.f32 %v880, %v888
          %v891 = vmin.f32 %v881, %v889
          %892 = vrot.lane.b32.xlu0 %v890, 127
          %v893 = vpop.permute.xlu0 %892
          %894 = vrot.lane.b32.xlu0 %v891, 127
          %v895 = vpop.permute.xlu0 %894
          %v896 = vsel %vm375, -1e+30, %v893
          %v897 = vsel %vm375, -1e+30, %v895
          %898 = vrot.lane.b32.xlu0 %v890, 1
          %v899 = vpop.permute.xlu0 %898
          %900 = vrot.lane.b32.xlu0 %v891, 1
          %v901 = vpop.permute.xlu0 %900
          %v902 = vsel %vm383, -1e+30, %v899
          %v903 = vsel %vm383, -1e+30, %v901
          %v904 = vmax.f32 %v896, %v890
          %v905 = vmax.f32 %v897, %v891
          %v906 = vmax.f32 %v904, %v902
          %v907 = vmax.f32 %v905, %v903
          %v908 = vrot.slane %v906, 1
          %v909 = vrot.slane %v907, 1
          %v910 = vsel %vm346, %v908, %v909
          %v911 = vsel %vm346, %v909, %v908
          %v912 = vsel %vm351, -1e+30, %v910
          %v913 = vsel %vm352, -1e+30, %v911
          %v914 = vrot.slane %v906, 7
          %v915 = vrot.slane %v907, 7
          %v916 = vsel %vm357, %v914, %v915
          %v917 = vsel %vm357, %v915, %v914
          %v918 = vsel %vm362, -1e+30, %v917
          %v919 = vsel %vm363, -1e+30, %v916
          %v920 = vmax.f32 %v912, %v906
          %v921 = vmax.f32 %v913, %v907
          %v922 = vmax.f32 %v920, %v918
          %v923 = vmax.f32 %v921, %v919
          %v924 = vsub.f32 %v820, %v922
          %v925 = vsub.f32 %v821, %v923
          %v926 = vmax.f32 %v924, 0.0
          %v927 = vmax.f32 %v925, 0.0
          %v928 = vmul.f32 %v864, %v926
          %v929 = vmul.f32 %v865, %v927
          %v930 = vsub.f32 %v926, %v928
          %v931 = vsub.f32 %v927, %v929
          %v932 = vmax.f32 %v930, 0.0
          %v933 = vmax.f32 %v931, 0.0
          %v934 = vadd.f32 %v864, %v932
          %v935 = vadd.f32 %v865, %v933
          %v936 = vmul.f32 %v934, %v288
          %v937 = vmul.f32 %v935, %v289
          %v938 = vadd.f32 %v936, %v937
          %v939 = vrot.slane %v938, 4
          %v940 = vadd.f32 %v938, %v939
          %v941 = vrot.slane %v940, 2
          %v942 = vadd.f32 %v940, %v941
          %v943 = vrot.slane %v942, 1
          %v944 = vadd.f32 %v942, %v943
          %945 = vst [vmem:[%s227 + $0x6] sm:$0x1] %v944
          %v946 = vadd.f32 %v934, %v935
          %v947 = vrot.slane %v946, 4
          %v948 = vadd.f32 %v946, %v947
          %v949 = vrot.slane %v948, 2
          %v950 = vadd.f32 %v948, %v949
          %v951 = vrot.slane %v950, 1
          %v952 = vadd.f32 %v950, %v951
          %953 = vst [vmem:[%s227 + $0x7] sm:$0x1] %v952
        $region44: #{tpu_custom_call.1} parent=27 // pred_fallthru
          _
        %s954 = sand.u32 %s100, 1
        %s955 = scalar_lea.sflag [#allocation4], %s954
        %s956 = sand.u32 %s100, 1
        %s957 = smul.addr %s956, 8
        %s958 = scalar_lea.vmem [#allocation7], %s957
        // Predicated region
        $region45: #{tpu_custom_call.1} parent=27 // pred_check
          %p959 = pneg %p110
        $region46: #{tpu_custom_call.1} parent=27 // pred_check_branch
          %961 = sbr.rel (%p959) target = $region48
        $region47: #{tpu_custom_call.1} parent=27 // pred_region
          %963 = vsyncadd %s955, 0
          %s964 = smul.addr %s26, 2
          %s965 = sadd.s32 %s27, %s964
          %s966 = smul.addr %s965, 8
          %s967 = scalar_lea.hbm %s2, %s966
          %s969 = sshll.u32 %s958, 4
          %s970 = int_to_ptr.vmem [resolvable:$true] %s969
          %s971 = sshll.u32 %s967, 4
          %s972 = int_to_ptr.hbm [resolvable:$true] %s971
          %974 = dma.vmem_to_hbm [thread:$0]  %s970, 128, %s972, %s955
        $region48: #{tpu_custom_call.1} parent=27 // pred_fallthru
          _
      $region28: #{tpu_custom_call.1} parent=5 // pred_fallthru
        _
      %p975 = scmp.le.s32.totalorder 2, %s17
      // Predicated region
      $region49: #{tpu_custom_call.1} parent=5 // pred_check
        %p976 = pneg %p975
      $region50: #{tpu_custom_call.1} parent=5 // pred_check_branch
        %978 = sbr.rel (%p976) target = $region52
      $region51: #{tpu_custom_call.1} parent=5 // pred_region
        %s979 = ssub.s32 %s17, 2
        // Predicated region
        $region53: #{tpu_custom_call.1} parent=51 // pred_check
          %p980 = pneg %p116
        $region54: #{tpu_custom_call.1} parent=51 // pred_check_branch
          %982 = sbr.rel (%p980) target = $region56
        $region55: #{tpu_custom_call.1} parent=51 // pred_region
          %s983 = sand.u32 %s101, 1
          %s984 = scalar_lea.sflag [#allocation4], %s983
          %s985 = sand.u32 %s101, 1
          %s986 = smul.addr %s985, 8
          %s987 = scalar_lea.vmem [#allocation7], %s986
          %989 = dma.done %s984, 128
        $region56: #{tpu_custom_call.1} parent=51 // pred_fallthru
          _
      $region52: #{tpu_custom_call.1} parent=5 // pred_fallthru
        _
    $region6: #{tpu_custom_call.1} parent=1 // loop_footer
      %s21 = sadd.s32 1, %s17
    $region7: #{tpu_custom_call.1} parent=1 // loop_footer_branch
      %16 = sbr.rel target = $region3
    $region8: #{tpu_custom_call.1} parent=1 // loop_exit
      _
    %990 = vsyncpa [#allocation3], 1
    %s991 = scalar_lea.sflag [#allocation3], 1
    %992 = vsyncpa %s991, 1
    %993 = vsyncpa [#allocation6], 1
    %s994 = scalar_lea.sflag [#allocation6], 1
    %995 = vsyncpa %s994, 1
    %996 = vsyncpa [#allocation4], 1
    %s997 = scalar_lea.sflag [#allocation4], 1
    %998 = vsyncpa %s997, 1

</llo_original>
